<compile_context>
chip_gen: v7x
topology: tpu7x:2x2x1
jax: 0.10.0
libtpu: 0.0.40
codegen_flags: <defaults>
</compile_context>

<pallas_src>
import functools

import jax
import jax.numpy as jnp
from jax import lax
from jax.experimental import pallas as pl
from jax.experimental.pallas import tpu as pltpu

MIN_NORM = 1e-15
EPS_F32 = 4e-3          # PoincareBall.eps[torch.float32]
ARTANH_CLAMP = 1e-7     # fp32-safe clamp (torch's 1e-15 clamp is a no-op in fp32)


# --------------------------------------------------------------------------------------
# PoincareBall math helpers (pure jnp; shared by the kernel epilogue, the host-side bias
# precompute and the reference, so kernel/reference only differ in matmul accumulation
# order).
# --------------------------------------------------------------------------------------
def _artanh(x):
    x = jnp.clip(x, -1.0 + ARTANH_CLAMP, 1.0 - ARTANH_CLAMP)
    # single-log form (one transcendental + one (TM,1) divide instead of two logs)
    return 0.5 * jnp.log((1.0 + x) / (1.0 - x))


def _norm(x):
    return jnp.maximum(jnp.sqrt(jnp.sum(x * x, axis=-1, keepdims=True)), MIN_NORM)


def _proj(x, c):
    norm = _norm(x)
    maxnorm = (1.0 - EPS_F32) / jnp.sqrt(c)
    scale = jnp.where(norm > maxnorm, maxnorm / norm, 1.0)   # (.., 1) scale, broadcast-mul
    return scale * x


def _expmap0(u, c):
    sqrt_c = jnp.sqrt(c)
    u_norm = _norm(u)
    return (jnp.tanh(sqrt_c * u_norm) / (sqrt_c * u_norm)) * u


def _hnn_epilogue(mx, x_norm, hyp_bias, c, act, n_valid_cols):
    """Everything after the MXU part of mobius_matvec.

    mx:           [TM, Dp] f32 accumulator of x @ W^T (Dp = lane-padded Dout)
    x_norm:       [TM, 1]  f32 row norms of the *original* x
    hyp_bias:     [1, Dp]  f32 precomputed proj(expmap0(bias))  (padded lanes are 0)
    n_valid_cols: real Dout if Dp > Dout (padded lanes re-masked after act), else None
    """
    sqrt_c = jnp.sqrt(c)
    maxnorm = (1.0 - EPS_F32) / sqrt_c

    # ---- mobius_matvec tail: res = tanh(|Mx|/|x| * artanh(sqrt_c|x|)) * Mx / (|Mx| sqrt_c)
    mx2 = jnp.sum(mx * mx, axis=-1, keepdims=True)
    mx_norm = jnp.maximum(jnp.sqrt(mx2), MIN_NORM)
    t = jnp.tanh(mx_norm / x_norm * _artanh(sqrt_c * x_norm))
    res_scale = jnp.where(mx2 == 0.0, 0.0, t / (mx_norm * sqrt_c))      # (TM,1), >= 0
    # proj(res): analytic norm of res_scale*mx is res_scale*mx_norm
    res_norm = jnp.maximum(res_scale * mx_norm, MIN_NORM)
    res_scale = jnp.where(res_norm > maxnorm, res_scale * (maxnorm / res_norm), res_scale)
    res = res_scale * mx

    # ---- hyperbolic bias: mobius_add(res, hyp_bias) -> proj
    x2 = jnp.sum(res * res, axis=-1, keepdims=True)
    y2 = jnp.sum(hyp_bias * hyp_bias, axis=-1, keepdims=True)
    xy = jnp.sum(res * hyp_bias, axis=-1, keepdims=True)
    num = (1.0 + 2.0 * c * xy + c * y2) * res + (1.0 - c * x2) * hyp_bias
    inv_denom = 1.0 / jnp.maximum(1.0 + 2.0 * c * xy + (c * c) * x2 * y2, MIN_NORM)
    h = _proj(num * inv_denom, c)

    # ---- HypAct: act(logmap0(h)) -> proj_tan0(identity) -> expmap0 -> proj
    h_norm = _norm(h)
    xt = act((_artanh(sqrt_c * h_norm) / (sqrt_c * h_norm)) * h)
    if n_valid_cols is not None:
        # keep padded lanes exactly zero even if act(0) != 0
        col = lax.broadcasted_iota(jnp.int32, xt.shape, dimension=1)
        xt = jnp.where(col < n_valid_cols, xt, 0.0)
    xt_norm = _norm(xt)
    th = jnp.tanh(sqrt_c * xt_norm)
    out = (th / (sqrt_c * xt_norm)) * xt
    # proj(out): analytic norm of out is tanh(sqrt_c*xt_norm)/sqrt_c
    out_norm = jnp.maximum(th / sqrt_c, MIN_NORM)
    out_scale = jnp.where(out_norm > maxnorm, maxnorm / out_norm, 1.0)
    return out_scale * out


# --------------------------------------------------------------------------------------
# Pallas kernels
# --------------------------------------------------------------------------------------
def _hnn_kernel_resident(x_ref, wt_ref, hb_ref, o_ref, *, c, act, n_valid_cols):
    """W^T (bf16) and hyp_bias VMEM-resident; one pass over x per row tile."""
    x = x_ref[...].astype(jnp.float32)
    x_norm = jnp.maximum(jnp.sqrt(jnp.sum(x * x, axis=-1, keepdims=True)), MIN_NORM)
    mx = jnp.dot(x.astype(jnp.bfloat16), wt_ref[...],
                 preferred_element_type=jnp.float32)
    out = _hnn_epilogue(mx, x_norm, hb_ref[...], jnp.float32(c), act, n_valid_cols)
    o_ref[...] = out.astype(o_ref.dtype)


def _hnn_kernel_ktiled(x_ref, wt_ref, hb_ref, o_ref, acc_ref, xsq_ref, *,
                       c, act, n_valid_cols):
    """Fallback for large Din: (rows, k) grid, pure DMA+MXU inner loop, fused epilogue."""
    k = pl.program_id(1)

    @pl.when(k == 0)
    def _init():
        acc_ref[...] = jnp.zeros_like(acc_ref)
        xsq_ref[...] = jnp.zeros_like(xsq_ref)

    x_blk = x_ref[...].astype(jnp.float32)
    xsq_ref[...] += jnp.sum(x_blk * x_blk, axis=-1, keepdims=True)
    acc_ref[...] += jnp.dot(x_blk.astype(jnp.bfloat16), wt_ref[...],
                            preferred_element_type=jnp.float32)

    @pl.when(k == pl.num_programs(1) - 1)
    def _epilogue():
        x_norm = jnp.maximum(jnp.sqrt(xsq_ref[...]), MIN_NORM)
        out = _hnn_epilogue(acc_ref[...], x_norm, hb_ref[...], jnp.float32(c), act,
                            n_valid_cols)
        o_ref[...] = out.astype(o_ref.dtype)


def _round_up(v, m):
    return ((v + m - 1) // m) * m


def _vmem_limit(est_bytes):
    # derive the scoped-VMEM limit from the real tile footprint (1.5x headroom),
    # never below the 32 MiB default; cap well under the smallest physical VMEM.
    return int(min(96 * 1024 * 1024, max(32 * 1024 * 1024, int(1.5 * est_bytes))))


def hnn_layer(x, weight, bias, c=1.0, act=jax.nn.relu, *,
              block_m=512, block_k=512, resident_w_bytes=8 * 1024 * 1024):
    """HNNLayer forward (eval mode). x: [N, Din] on the Poincare ball,
    weight: [Dout, Din], bias: [Dout]."""
    n, d_in = x.shape
    d_out, d_in_w = weight.shape
    assert d_in == d_in_w, (d_in, d_in_w)
    c_f = jnp.float32(c)
    xsz = jnp.dtype(x.dtype).itemsize

    # ---- host-side prep --------------------------------------------------------------
    # Lane-dense output: pad Dout to a multiple of 128 with zeros (numerically neutral).
    d_out_p = _round_up(d_out, 128)
    n_valid_cols = d_out if d_out_p != d_out else None

    # hyp_bias is a constant of the layer; precompute proj(expmap0(proj_tan0(b))) once.
    hyp_bias = _proj(_expmap0(bias.reshape(1, -1).astype(jnp.float32), c_f), c_f)
    hyp_bias = jnp.pad(hyp_bias, ((0, 0), (0, d_out_p - d_out)))

    # W^T in bf16 (native MXU dtype; halves HBM traffic + VMEM), padded output columns.
    wt = jnp.pad(weight, ((0, d_out_p - d_out), (0, 0))).T.astype(jnp.bfloat16)  # [Din,Dp]

    # dtype-aware row tile (sublane unit 16 for bf16 inputs), rows zero-padded so awkward
    # N can't fall back to an oversized tile. Zero rows are harmless (zero-row mobius path).
    sub = {4: 8, 2: 16, 1: 32}.get(xsz, 8)
    tm = min(_round_up(block_m, sub), _round_up(n, sub))
    n_p = _round_up(n, tm)
    if n_p != n:
        x = jnp.pad(x, ((0, n_p - n), (0, 0)))

    out_shape = jax.ShapeDtypeStruct((n_p, d_out_p), x.dtype)
    use_resident = d_in * d_out_p * 2 <= resident_w_bytes

    if use_resident:
        est = (2 * tm * d_in * xsz          # x double-buffer
               + 2 * d_in * d_out_p * 2     # resident W^T (bf16)
               + 2 * tm * d_out_p * xsz     # output double-buffer
               + 2 * d_out_p * 4)           # hyp_bias
        kernel = functools.partial(_hnn_kernel_resident, c=float(c), act=act,
                                   n_valid_cols=n_valid_cols)
        out = pl.pallas_call(
            kernel,
            out_shape=out_shape,
            grid_spec=pltpu.PrefetchScalarGridSpec(
                num_scalar_prefetch=0,
                grid=(n_p // tm,),
                in_specs=[
                    pl.BlockSpec((tm, d_in), lambda i: (i, 0)),        # x row tile
                    pl.BlockSpec((d_in, d_out_p), lambda i: (0, 0)),   # resident W^T
                    pl.BlockSpec((1, d_out_p), lambda i: (0, 0)),      # resident hyp_bias
                ],
                out_specs=pl.BlockSpec((tm, d_out_p), lambda i: (i, 0)),
            ),
            compiler_params=pltpu.CompilerParams(
                # row axis shards across the 2 TensorCores on v7x; harmless elsewhere.
                dimension_semantics=("parallel",),
                vmem_limit_bytes=_vmem_limit(est),
            ),
        )(x, wt, hyp_bias)
    else:
        # K-tiled fallback for large Din: zero-pad K to a lane multiple as well.
        tk = min(_round_up(block_k, 128), _round_up(d_in, 128))
        d_in_p = _round_up(d_in, tk)
        if d_in_p != d_in:
            x = jnp.pad(x, ((0, 0), (0, d_in_p - d_in)))
            wt = jnp.pad(wt, ((0, d_in_p - d_in), (0, 0)))
        est = (2 * tm * tk * xsz             # x double-buffer
               + 2 * tk * d_out_p * 2        # W^T double-buffer (bf16)
               + 2 * tm * d_out_p * xsz      # output double-buffer
               + tm * d_out_p * 4 + tm * 4   # f32 accumulators
               + 2 * d_out_p * 4)            # hyp_bias
        kernel = functools.partial(_hnn_kernel_ktiled, c=float(c), act=act,
                                   n_valid_cols=n_valid_cols)
        out = pl.pallas_call(
            kernel,
            out_shape=out_shape,
            grid_spec=pltpu.PrefetchScalarGridSpec(
                num_scalar_prefetch=0,
                grid=(n_p // tm, d_in_p // tk),
                in_specs=[
                    pl.BlockSpec((tm, tk), lambda i, k: (i, k)),        # x rows x K-block
                    pl.BlockSpec((tk, d_out_p), lambda i, k: (k, 0)),   # W^T K-block
                    pl.BlockSpec((1, d_out_p), lambda i, k: (0, 0)),    # hyp_bias
                ],
                out_specs=pl.BlockSpec((tm, d_out_p), lambda i, k: (i, 0)),
                scratch_shapes=[
                    pltpu.VMEM((tm, d_out_p), jnp.float32),  # mx accumulator
                    pltpu.VMEM((tm, 1), jnp.float32),        # ||x||^2 accumulator
                ],
            ),
            compiler_params=pltpu.CompilerParams(
                dimension_semantics=("parallel", "arbitrary"),
                vmem_limit_bytes=_vmem_limit(est),
            ),
        )(x, wt, hyp_bias)

    return out[:n, :d_out]


# --------------------------------------------------------------------------------------
# Pure-JAX reference (same math as the PyTorch module; same bf16-MXU contract as kernel)
# --------------------------------------------------------------------------------------
def _reference(x, weight, bias, c=1.0, act=jax.nn.relu):
    c = jnp.float32(c)
    xf = x.astype(jnp.float32)
    x_norm = jnp.maximum(jnp.sqrt(jnp.sum(xf * xf, axis=-1, keepdims=True)), MIN_NORM)
    mx = jnp.dot(xf.astype(jnp.bfloat16), weight.T.astype(jnp.bfloat16),
                 preferred_element_type=jnp.float32)
    hyp_bias = _proj(_expmap0(bias.reshape(1, -1).astype(jnp.float32), c), c)
    return _hnn_epilogue(mx, x_norm, hyp_bias, c, act, None)


if __name__ == "__main__":
    key = jax.random.PRNGKey(0)
    k1, k2, k3 = jax.random.split(key, 3)

    N, D_IN, D_OUT = 128, 256, 80   # Dout=80 exercises the lane-padding (->128) path
    c = 1.0

    # Points on the Poincare ball: random tangent vectors pushed through expmap0 + proj.
    u = 0.5 * jax.random.normal(k1, (N, D_IN), dtype=jnp.float32)
    x = _proj(_expmap0(u, jnp.float32(c)), jnp.float32(c))

    # HypLinear parameters (xavier-scaled weight; small random bias so the
    # mobius_add bias path is actually exercised).
    weight = (jax.random.normal(k2, (D_OUT, D_IN), dtype=jnp.float32)
              * jnp.sqrt(2.0 / (D_IN + D_OUT)))
    bias = 0.01 * jax.random.normal(k3, (D_OUT,), dtype=jnp.float32)

    ref = _reference(x, weight, bias, c=c, act=jax.nn.relu)

    # Resident-W path (default for typical HNN sizes); block_m=64 -> row grid of 2.
    out_res = hnn_layer(x, weight, bias, c=c, act=jax.nn.relu, block_m=64)
    out_res = jax.block_until_ready(out_res)
    assert out_res.shape == (N, D_OUT)
    err = float(jnp.max(jnp.abs(out_res - ref)))
    assert jnp.allclose(out_res, ref, atol=1e-4, rtol=1e-4), f"resident max abs err {err}"

    # K-tiled fallback path (forced) so the (rows, k) reduction grid is also exercised.
    out_kt = hnn_layer(x, weight, bias, c=c, act=jax.nn.relu,
                       block_m=64, block_k=128, resident_w_bytes=0)
    out_kt = jax.block_until_ready(out_kt)
    assert out_kt.shape == (N, D_OUT)
    err2 = float(jnp.max(jnp.abs(out_kt - ref)))
    assert jnp.allclose(out_kt, ref, atol=1e-4, rtol=1e-4), f"ktiled max abs err {err2}"

    print("KERNEL_OK")
</pallas_src>

<mosaic_0001>
module attributes {stable_mosaic.version = 11 : i64} {
  func.func @_hnn_kernel_resident(%arg0: i32, %arg1: memref<64x256xf32, #tpu.memory_space<vmem>>, %arg2: memref<256x128xbf16, #tpu.memory_space<vmem>>, %arg3: memref<1x128xf32, #tpu.memory_space<vmem>>, %arg4: memref<64x128xf32, #tpu.memory_space<vmem>>) attributes {dimension_semantics = [#tpu.dimension_semantics<parallel>], iteration_bounds = array<i64: 2>, scalar_prefetch = 0 : i64, scratch_operands = 0 : i64, tpu.core_type = #tpu.core_type<tc>, window_params = [{transform_indices = @transform_0, window_bounds = array<i64: 64, 256>}, {pipeline_mode = #tpu.pipeline_mode<synchronous>, transform_indices = @transform_1, window_bounds = array<i64: 256, 128>}, {pipeline_mode = #tpu.pipeline_mode<synchronous>, transform_indices = @transform_2, window_bounds = array<i64: 1, 128>}, {transform_indices = @transform_3, window_bounds = array<i64: 64, 128>}]} {
    %c0 = arith.constant 0 : index
    %c0_0 = arith.constant 0 : index
    %0 = vector.load %arg1[%c0, %c0_0] : memref<64x256xf32, #tpu.memory_space<vmem>>, vector<64x256xf32>
    %1 = arith.mulf %0, %0 : vector<64x256xf32>
    %cst = arith.constant dense<0.000000e+00> : vector<64xf32>
    %2 = vector.multi_reduction <add>, %1, %cst [1] : vector<64x256xf32> to vector<64xf32>
    %3 = vector.shape_cast %2 : vector<64xf32> to vector<64x1xf32>
    %4 = math.sqrt %3 : vector<64x1xf32>
    %cst_1 = arith.constant 1.000000e-15 : f32
    %5 = vector.broadcast %cst_1 : f32 to vector<64x1xf32>
    %6 = arith.maximumf %4, %5 : vector<64x1xf32>
    %7 = arith.truncf %0 : vector<64x256xf32> to vector<64x256xbf16>
    %c0_2 = arith.constant 0 : index
    %c0_3 = arith.constant 0 : index
    %8 = vector.load %arg2[%c0_2, %c0_3] : memref<256x128xbf16, #tpu.memory_space<vmem>>, vector<256x128xbf16>
    %cst_4 = arith.constant dense<0.000000e+00> : vector<64x128xf32>
    %9 = tpu.matmul %7, %8, %cst_4 {dimension_numbers = #tpu.dot_dimension_numbers<[1], [0], [0], [1], [0, 0, 1, 1], [], []>} : vector<64x256xbf16>, vector<256x128xbf16>, vector<64x128xf32> -> vector<64x128xf32>
    %c0_5 = arith.constant 0 : index
    %c0_6 = arith.constant 0 : index
    %10 = vector.load %arg3[%c0_5, %c0_6] : memref<1x128xf32, #tpu.memory_space<vmem>>, vector<1x128xf32>
    %cst_7 = arith.constant 1.000000e+00 : f32
    %11 = math.sqrt %cst_7 : f32
    %cst_8 = arith.constant 0.995999991 : f32
    %12 = arith.divf %cst_8, %11 : f32
    %13 = arith.mulf %9, %9 : vector<64x128xf32>
    %cst_9 = arith.constant dense<0.000000e+00> : vector<64xf32>
    %14 = vector.multi_reduction <add>, %13, %cst_9 [1] : vector<64x128xf32> to vector<64xf32>
    %15 = vector.shape_cast %14 : vector<64xf32> to vector<64x1xf32>
    %16 = math.sqrt %15 : vector<64x1xf32>
    %cst_10 = arith.constant 1.000000e-15 : f32
    %17 = vector.broadcast %cst_10 : f32 to vector<64x1xf32>
    %18 = arith.maximumf %16, %17 : vector<64x1xf32>
    %19 = arith.divf %18, %6 : vector<64x1xf32>
    %20 = vector.broadcast %11 : f32 to vector<64x1xf32>
    %21 = arith.mulf %20, %6 : vector<64x1xf32>
    %cst_11 = arith.constant -0.99999988 : f32
    %cst_12 = arith.constant 0.99999988 : f32
    %22 = vector.broadcast %cst_11 : f32 to vector<64x1xf32>
    %23 = arith.maximumf %22, %21 : vector<64x1xf32>
    %24 = vector.broadcast %cst_12 : f32 to vector<64x1xf32>
    %25 = arith.minimumf %24, %23 : vector<64x1xf32>
    %cst_13 = arith.constant 1.000000e+00 : f32
    %26 = vector.broadcast %cst_13 : f32 to vector<64x1xf32>
    %27 = arith.addf %26, %25 : vector<64x1xf32>
    %cst_14 = arith.constant 1.000000e+00 : f32
    %28 = vector.broadcast %cst_14 : f32 to vector<64x1xf32>
    %29 = arith.subf %28, %25 : vector<64x1xf32>
    %30 = arith.divf %27, %29 : vector<64x1xf32>
    %31 = math.log %30 : vector<64x1xf32>
    %cst_15 = arith.constant 5.000000e-01 : f32
    %32 = vector.broadcast %cst_15 : f32 to vector<64x1xf32>
    %33 = arith.mulf %32, %31 : vector<64x1xf32>
    %34 = arith.mulf %19, %33 : vector<64x1xf32>
    %35 = math.tanh %34 : vector<64x1xf32>
    %cst_16 = arith.constant 0.000000e+00 : f32
    %36 = vector.broadcast %cst_16 : f32 to vector<64x1xf32>
    %37 = arith.cmpf oeq, %15, %36 : vector<64x1xf32>
    %38 = vector.broadcast %11 : f32 to vector<64x1xf32>
    %39 = arith.mulf %18, %38 : vector<64x1xf32>
    %40 = arith.divf %35, %39 : vector<64x1xf32>
    %cst_17 = arith.constant 0.000000e+00 : f32
    %41 = vector.broadcast %cst_17 : f32 to vector<64x1xf32>
    %42 = arith.select %37, %41, %40 : vector<64x1xi1>, vector<64x1xf32>
    %43 = arith.mulf %42, %18 : vector<64x1xf32>
    %cst_18 = arith.constant 1.000000e-15 : f32
    %44 = vector.broadcast %cst_18 : f32 to vector<64x1xf32>
    %45 = arith.maximumf %43, %44 : vector<64x1xf32>
    %46 = vector.broadcast %12 : f32 to vector<64x1xf32>
    %47 = arith.cmpf ogt, %45, %46 : vector<64x1xf32>
    %48 = vector.broadcast %12 : f32 to vector<64x1xf32>
    %49 = arith.divf %48, %45 : vector<64x1xf32>
    %50 = arith.mulf %42, %49 : vector<64x1xf32>
    %51 = arith.select %47, %50, %42 : vector<64x1xi1>, vector<64x1xf32>
    %52 = vector.broadcast %51 : vector<64x1xf32> to vector<64x128xf32>
    %53 = arith.mulf %52, %9 : vector<64x128xf32>
    %54 = arith.mulf %53, %53 : vector<64x128xf32>
    %cst_19 = arith.constant dense<0.000000e+00> : vector<64xf32>
    %55 = vector.multi_reduction <add>, %54, %cst_19 [1] : vector<64x128xf32> to vector<64xf32>
    %56 = vector.shape_cast %55 : vector<64xf32> to vector<64x1xf32>
    %57 = arith.mulf %10, %10 : vector<1x128xf32>
    %cst_20 = arith.constant dense<0.000000e+00> : vector<1xf32>
    %58 = vector.multi_reduction <add>, %57, %cst_20 [1] : vector<1x128xf32> to vector<1xf32>
    %59 = vector.shape_cast %58 : vector<1xf32> to vector<1x1xf32>
    %60 = vector.broadcast %10 : vector<1x128xf32> to vector<64x128xf32>
    %61 = arith.mulf %53, %60 : vector<64x128xf32>
    %cst_21 = arith.constant dense<0.000000e+00> : vector<64xf32>
    %62 = vector.multi_reduction <add>, %61, %cst_21 [1] : vector<64x128xf32> to vector<64xf32>
    %63 = vector.shape_cast %62 : vector<64xf32> to vector<64x1xf32>
    %cst_22 = arith.constant 2.000000e+00 : f32
    %cst_23 = arith.constant 1.000000e+00 : f32
    %64 = arith.mulf %cst_22, %cst_23 : f32
    %65 = vector.broadcast %64 : f32 to vector<64x1xf32>
    %66 = arith.mulf %65, %63 : vector<64x1xf32>
    %cst_24 = arith.constant 1.000000e+00 : f32
    %67 = vector.broadcast %cst_24 : f32 to vector<64x1xf32>
    %68 = arith.addf %67, %66 : vector<64x1xf32>
    %cst_25 = arith.constant 1.000000e+00 : f32
    %69 = vector.broadcast %cst_25 : f32 to vector<1x1xf32>
    %70 = arith.mulf %69, %59 : vector<1x1xf32>
    %71 = vector.broadcast %70 : vector<1x1xf32> to vector<64x1xf32>
    %72 = arith.addf %68, %71 : vector<64x1xf32>
    %73 = vector.broadcast %72 : vector<64x1xf32> to vector<64x128xf32>
    %74 = arith.mulf %73, %53 : vector<64x128xf32>
    %cst_26 = arith.constant 1.000000e+00 : f32
    %75 = vector.broadcast %cst_26 : f32 to vector<64x1xf32>
    %76 = arith.mulf %75, %56 : vector<64x1xf32>
    %cst_27 = arith.constant 1.000000e+00 : f32
    %77 = vector.broadcast %cst_27 : f32 to vector<64x1xf32>
    %78 = arith.subf %77, %76 : vector<64x1xf32>
    %79 = vector.broadcast %78 : vector<64x1xf32> to vector<64x128xf32>
    %80 = vector.broadcast %10 : vector<1x128xf32> to vector<64x128xf32>
    %81 = arith.mulf %79, %80 : vector<64x128xf32>
    %82 = arith.addf %74, %81 : vector<64x128xf32>
    %cst_28 = arith.constant 2.000000e+00 : f32
    %cst_29 = arith.constant 1.000000e+00 : f32
    %83 = arith.mulf %cst_28, %cst_29 : f32
    %84 = vector.broadcast %83 : f32 to vector<64x1xf32>
    %85 = arith.mulf %84, %63 : vector<64x1xf32>
    %cst_30 = arith.constant 1.000000e+00 : f32
    %86 = vector.broadcast %cst_30 : f32 to vector<64x1xf32>
    %87 = arith.addf %86, %85 : vector<64x1xf32>
    %cst_31 = arith.constant 1.000000e+00 : f32
    %cst_32 = arith.constant 1.000000e+00 : f32
    %88 = arith.mulf %cst_31, %cst_32 : f32
    %89 = vector.broadcast %88 : f32 to vector<64x1xf32>
    %90 = arith.mulf %89, %56 : vector<64x1xf32>
    %91 = vector.broadcast %59 : vector<1x1xf32> to vector<64x1xf32>
    %92 = arith.mulf %90, %91 : vector<64x1xf32>
    %93 = arith.addf %87, %92 : vector<64x1xf32>
    %cst_33 = arith.constant 1.000000e-15 : f32
    %94 = vector.broadcast %cst_33 : f32 to vector<64x1xf32>
    %95 = arith.maximumf %93, %94 : vector<64x1xf32>
    %cst_34 = arith.constant 1.000000e+00 : f32
    %96 = vector.broadcast %cst_34 : f32 to vector<64x1xf32>
    %97 = arith.divf %96, %95 : vector<64x1xf32>
    %98 = vector.broadcast %97 : vector<64x1xf32> to vector<64x128xf32>
    %99 = arith.mulf %82, %98 : vector<64x128xf32>
    %100 = arith.mulf %99, %99 : vector<64x128xf32>
    %cst_35 = arith.constant dense<0.000000e+00> : vector<64xf32>
    %101 = vector.multi_reduction <add>, %100, %cst_35 [1] : vector<64x128xf32> to vector<64xf32>
    %102 = vector.shape_cast %101 : vector<64xf32> to vector<64x1xf32>
    %103 = math.sqrt %102 : vector<64x1xf32>
    %cst_36 = arith.constant 1.000000e-15 : f32
    %104 = vector.broadcast %cst_36 : f32 to vector<64x1xf32>
    %105 = arith.maximumf %103, %104 : vector<64x1xf32>
    %cst_37 = arith.constant 1.000000e+00 : f32
    %106 = math.sqrt %cst_37 : f32
    %cst_38 = arith.constant 0.995999991 : f32
    %107 = arith.divf %cst_38, %106 : f32
    %108 = vector.broadcast %107 : f32 to vector<64x1xf32>
    %109 = arith.cmpf ogt, %105, %108 : vector<64x1xf32>
    %110 = vector.broadcast %107 : f32 to vector<64x1xf32>
    %111 = arith.divf %110, %105 : vector<64x1xf32>
    %cst_39 = arith.constant 1.000000e+00 : f32
    %112 = vector.broadcast %cst_39 : f32 to vector<64x1xf32>
    %113 = arith.select %109, %111, %112 : vector<64x1xi1>, vector<64x1xf32>
    %114 = vector.broadcast %113 : vector<64x1xf32> to vector<64x128xf32>
    %115 = arith.mulf %114, %99 : vector<64x128xf32>
    %116 = arith.mulf %115, %115 : vector<64x128xf32>
    %cst_40 = arith.constant dense<0.000000e+00> : vector<64xf32>
    %117 = vector.multi_reduction <add>, %116, %cst_40 [1] : vector<64x128xf32> to vector<64xf32>
    %118 = vector.shape_cast %117 : vector<64xf32> to vector<64x1xf32>
    %119 = math.sqrt %118 : vector<64x1xf32>
    %cst_41 = arith.constant 1.000000e-15 : f32
    %120 = vector.broadcast %cst_41 : f32 to vector<64x1xf32>
    %121 = arith.maximumf %119, %120 : vector<64x1xf32>
    %122 = vector.broadcast %11 : f32 to vector<64x1xf32>
    %123 = arith.mulf %122, %121 : vector<64x1xf32>
    %cst_42 = arith.constant -0.99999988 : f32
    %cst_43 = arith.constant 0.99999988 : f32
    %124 = vector.broadcast %cst_42 : f32 to vector<64x1xf32>
    %125 = arith.maximumf %124, %123 : vector<64x1xf32>
    %126 = vector.broadcast %cst_43 : f32 to vector<64x1xf32>
    %127 = arith.minimumf %126, %125 : vector<64x1xf32>
    %cst_44 = arith.constant 1.000000e+00 : f32
    %128 = vector.broadcast %cst_44 : f32 to vector<64x1xf32>
    %129 = arith.addf %128, %127 : vector<64x1xf32>
    %cst_45 = arith.constant 1.000000e+00 : f32
    %130 = vector.broadcast %cst_45 : f32 to vector<64x1xf32>
    %131 = arith.subf %130, %127 : vector<64x1xf32>
    %132 = arith.divf %129, %131 : vector<64x1xf32>
    %133 = math.log %132 : vector<64x1xf32>
    %cst_46 = arith.constant 5.000000e-01 : f32
    %134 = vector.broadcast %cst_46 : f32 to vector<64x1xf32>
    %135 = arith.mulf %134, %133 : vector<64x1xf32>
    %136 = vector.broadcast %11 : f32 to vector<64x1xf32>
    %137 = arith.mulf %136, %121 : vector<64x1xf32>
    %138 = arith.divf %135, %137 : vector<64x1xf32>
    %139 = vector.broadcast %138 : vector<64x1xf32> to vector<64x128xf32>
    %140 = arith.mulf %139, %115 : vector<64x128xf32>
    %cst_47 = arith.constant 0.000000e+00 : f32
    %141 = vector.broadcast %cst_47 : f32 to vector<64x128xf32>
    %142 = arith.maximumf %140, %141 : vector<64x128xf32>
    %143 = tpu.iota {dimensions = array<i32: 1>} : vector<64x128xi32>
    %c80_i32 = arith.constant 80 : i32
    %144 = vector.broadcast %c80_i32 : i32 to vector<64x128xi32>
    %145 = arith.cmpi slt, %143, %144 : vector<64x128xi32>
    %cst_48 = arith.constant 0.000000e+00 : f32
    %146 = vector.broadcast %cst_48 : f32 to vector<64x128xf32>
    %147 = arith.select %145, %142, %146 : vector<64x128xi1>, vector<64x128xf32>
    %148 = arith.mulf %147, %147 : vector<64x128xf32>
    %cst_49 = arith.constant dense<0.000000e+00> : vector<64xf32>
    %149 = vector.multi_reduction <add>, %148, %cst_49 [1] : vector<64x128xf32> to vector<64xf32>
    %150 = vector.shape_cast %149 : vector<64xf32> to vector<64x1xf32>
    %151 = math.sqrt %150 : vector<64x1xf32>
    %cst_50 = arith.constant 1.000000e-15 : f32
    %152 = vector.broadcast %cst_50 : f32 to vector<64x1xf32>
    %153 = arith.maximumf %151, %152 : vector<64x1xf32>
    %154 = vector.broadcast %11 : f32 to vector<64x1xf32>
    %155 = arith.mulf %154, %153 : vector<64x1xf32>
    %156 = math.tanh %155 : vector<64x1xf32>
    %157 = vector.broadcast %11 : f32 to vector<64x1xf32>
    %158 = arith.mulf %157, %153 : vector<64x1xf32>
    %159 = arith.divf %156, %158 : vector<64x1xf32>
    %160 = vector.broadcast %159 : vector<64x1xf32> to vector<64x128xf32>
    %161 = arith.mulf %160, %147 : vector<64x128xf32>
    %162 = vector.broadcast %11 : f32 to vector<64x1xf32>
    %163 = arith.divf %156, %162 : vector<64x1xf32>
    %cst_51 = arith.constant 1.000000e-15 : f32
    %164 = vector.broadcast %cst_51 : f32 to vector<64x1xf32>
    %165 = arith.maximumf %163, %164 : vector<64x1xf32>
    %166 = vector.broadcast %12 : f32 to vector<64x1xf32>
    %167 = arith.cmpf ogt, %165, %166 : vector<64x1xf32>
    %168 = vector.broadcast %12 : f32 to vector<64x1xf32>
    %169 = arith.divf %168, %165 : vector<64x1xf32>
    %cst_52 = arith.constant 1.000000e+00 : f32
    %170 = vector.broadcast %cst_52 : f32 to vector<64x1xf32>
    %171 = arith.select %167, %169, %170 : vector<64x1xi1>, vector<64x1xf32>
    %172 = vector.broadcast %171 : vector<64x1xf32> to vector<64x128xf32>
    %173 = arith.mulf %172, %161 : vector<64x128xf32>
    %c0_53 = arith.constant 0 : index
    %c0_54 = arith.constant 0 : index
    %174 = vector.load %arg4[%c0_53, %c0_54] : memref<64x128xf32, #tpu.memory_space<vmem>>, vector<64x128xf32>
    tpu.vector_store %arg4[%c0_53, %c0_54], %173 {strides = array<i32>} : memref<64x128xf32, #tpu.memory_space<vmem>>, vector<64x128xf32>,
    return
  }
  func.func @transform_0(%arg0: i32) -> (i32, i32) {
    %c0_i32 = arith.constant 0 : i32
    %c0_i32_0 = arith.constant 0 : i32
    return %arg0, %c0_i32 : i32, i32
  }
  func.func @transform_1(%arg0: i32) -> (i32, i32) {
    %c0_i32 = arith.constant 0 : i32
    %c0_i32_0 = arith.constant 0 : i32
    %c0_i32_1 = arith.constant 0 : i32
    return %c0_i32, %c0_i32_0 : i32, i32
  }
  func.func @transform_2(%arg0: i32) -> (i32, i32) {
    %c0_i32 = arith.constant 0 : i32
    %c0_i32_0 = arith.constant 0 : i32
    %c0_i32_1 = arith.constant 0 : i32
    return %c0_i32, %c0_i32_0 : i32, i32
  }
  func.func @transform_3(%arg0: i32) -> (i32, i32) {
    %c0_i32 = arith.constant 0 : i32
    %c0_i32_0 = arith.constant 0 : i32
    return %arg0, %c0_i32 : i32, i32
  }
}

</mosaic_0001>

<llo_original>
// kernel: tpu_custom_call.1
$region0: #{tpu_custom_call.1}
  #allocation0 [shape = 'u32[]', space=smem, size = 0x4, offset = 0x4, fixed_abs, tag = 'smem constant byte address 0x4 - core index']
  #allocation1 [shape = 'u32[144,128]{1,0:T(1,128)}', space=vmem, size = 0x12000, scoped, tag = 'internal scratch']
  %s0 = inlined_call_operand.hbm [shape: f32[128,256], index: 0, kind: input, shape index: {}]
  %s1 = inlined_call_operand.hbm [shape: bf16[256,128], index: 1, kind: input, shape index: {}]
  %s2 = inlined_call_operand.vmem [shape: f32[1,128], index: 2, kind: input, shape index: {}]
  %s3 = inlined_call_operand.hbm [shape: f32[128,128], index: 3, kind: output, shape index: {}]
  %s4 = sld [smem:[#allocation0]]
  $region53: #{tpu_custom_call.1} parent=0
    _
  %s6 = ssub.s32 1, %s4
  %s7 = scalar_select 0, %s6, %s4
  $region1: #{tpu_custom_call.1} parent=0
    #allocation2 [shape = 'u8[131072]{0}', space=vmem, size = 0x20000, scoped, tag = 'input window, operand 0']
    #allocation3 [shape = 's32[2]{0}', space=sflag, size = 0x8, scoped, tag = 'scoped memory for tpu_custom_call.1']
    #allocation4 [shape = 's32[2]{0}', space=sflag, size = 0x8, scoped, tag = 'scoped memory for tpu_custom_call.1']
    #allocation5 [shape = 'u8[65536]{0}', space=vmem, size = 0x10000, scoped, tag = 'input window, operand 1, single buffered']
    #allocation6 [shape = 's32[1]{0}', space=sflag, size = 0x4, scoped, tag = 'scoped memory for tpu_custom_call.1']
    #allocation7 [shape = 'u8[65536]{0}', space=vmem, size = 0x10000, scoped, tag = 'output window, operand 0']
    %8 = vsyncpa [#allocation3], 0
    %s9 = scalar_lea.sflag [#allocation3], 1
    %10 = vsyncpa %s9, 0
    %11 = vsyncpa [#allocation6], 0
    %12 = vsyncpa [#allocation4], 0
    %s13 = scalar_lea.sflag [#allocation4], 1
    %14 = vsyncpa %s13, 0
    loop: start=0, step=1, limit=4
    $region2: #{tpu_custom_call.1} parent=1 // loop_pre_header
      _
    $region3: #{tpu_custom_call.1} parent=1 // loop_header
      %s16 = sphi 0, %s20
      %p17 = scmp.ge.s32.totalorder %s16, 4
      %s26 = sphi 0, %s28
      %s29 = sphi 0, %s26
      %s30 = sphi 0, %s29
      %s46 = sphi 0, %s30
      %s50 = sphi 0, %s50
      %s52 = sphi 0, %s50
      %s53 = sphi 0, %s52
      %s67 = sphi 0, %s53
      %s71 = sphi 0, %s71
      %s73 = sphi 0, %s71
      %s74 = sphi 0, %s73
      %s88 = sphi 0, %s74
      %s94 = sphi 0, %s96
      %s97 = sphi 0, %s94
      %s98 = sphi 0, %s97
      %s114 = sphi 0, %s98
    $region4: #{tpu_custom_call.1} parent=1 // loop_header_branch
      %19 = sbr.rel (%p17) target = $region8
    $region5: #{tpu_custom_call.1} parent=1 // loop_body
      %s21 = ssub.s32 %s16, 1
      %s22 = ssub.s32 %s16, 2
      %s23 = sadd.s32 %s16, 1
      %s24 = ssub.s32 %s16, %s23
      %p25 = scmp.eq.s32.totalorder %s24, 0
      %s27 = sadd.s32 %s26, 1
      %s28 = scalar_select %p25, %s26, %s27
      %p31 = pneg %p25
      %p32 = scmp.eq.s32.totalorder %s16, 1
      %p33 = por %p31, %p32
      %p34 = scmp.ne.s32.totalorder %s26, %s29
      %p35 = scmp.eq.s32.totalorder %s16, 0
      %p36 = por %p34, %p35
      %p37 = scmp.ne.s32.totalorder %s26, %s29
      %p38 = scmp.eq.s32.totalorder %s21, 1
      %p39 = por %p37, %p38
      %p40 = scmp.ne.s32.totalorder %s29, %s30
      %p41 = scmp.eq.s32.totalorder %s21, 0
      %p42 = por %p40, %p41
      %p43 = scmp.ne.s32.totalorder %s29, %s30
      %p44 = scmp.eq.s32.totalorder %s22, 1
      %p45 = por %p43, %p44
      %p47 = scmp.ne.s32.totalorder %s30, %s46
      %p48 = scmp.eq.s32.totalorder %s22, 0
      %p49 = por %p47, %p48
      %s51 = sadd.s32 %s50, 1
      %p54 = scmp.eq.s32.totalorder %s16, 1
      %p55 = scmp.ne.s32.totalorder %s50, %s52
      %p56 = scmp.eq.s32.totalorder %s16, 0
      %p57 = por %p55, %p56
      %p58 = scmp.ne.s32.totalorder %s50, %s52
      %p59 = scmp.eq.s32.totalorder %s21, 1
      %p60 = por %p58, %p59
      %p61 = scmp.ne.s32.totalorder %s52, %s53
      %p62 = scmp.eq.s32.totalorder %s21, 0
      %p63 = por %p61, %p62
      %p64 = scmp.ne.s32.totalorder %s52, %s53
      %p65 = scmp.eq.s32.totalorder %s22, 1
      %p66 = por %p64, %p65
      %p68 = scmp.ne.s32.totalorder %s53, %s67
      %p69 = scmp.eq.s32.totalorder %s22, 0
      %p70 = por %p68, %p69
      %s72 = sadd.s32 %s71, 1
      %p75 = scmp.eq.s32.totalorder %s16, 1
      %p76 = scmp.ne.s32.totalorder %s71, %s73
      %p77 = scmp.eq.s32.totalorder %s16, 0
      %p78 = por %p76, %p77
      %p79 = scmp.ne.s32.totalorder %s71, %s73
      %p80 = scmp.eq.s32.totalorder %s21, 1
      %p81 = por %p79, %p80
      %p82 = scmp.ne.s32.totalorder %s73, %s74
      %p83 = scmp.eq.s32.totalorder %s21, 0
      %p84 = por %p82, %p83
      %p85 = scmp.ne.s32.totalorder %s73, %s74
      %p86 = scmp.eq.s32.totalorder %s22, 1
      %p87 = por %p85, %p86
      %p89 = scmp.ne.s32.totalorder %s74, %s88
      %p90 = scmp.eq.s32.totalorder %s22, 0
      %p91 = por %p89, %p90
      %s92 = ssub.s32 %s16, %s23
      %p93 = scmp.eq.s32.totalorder %s92, 0
      %s95 = sadd.s32 %s94, 1
      %s96 = scalar_select %p93, %s94, %s95
      %p99 = pneg %p93
      %p100 = scmp.eq.s32.totalorder %s16, 1
      %p101 = por %p99, %p100
      %p102 = scmp.ne.s32.totalorder %s94, %s97
      %p103 = scmp.eq.s32.totalorder %s16, 0
      %p104 = por %p102, %p103
      %p105 = scmp.ne.s32.totalorder %s94, %s97
      %p106 = scmp.eq.s32.totalorder %s21, 1
      %p107 = por %p105, %p106
      %p108 = scmp.ne.s32.totalorder %s97, %s98
      %p109 = scmp.eq.s32.totalorder %s21, 0
      %p110 = por %p108, %p109
      %p111 = scmp.ne.s32.totalorder %s97, %s98
      %p112 = scmp.eq.s32.totalorder %s22, 1
      %p113 = por %p111, %p112
      %p115 = scmp.ne.s32.totalorder %s98, %s114
      %p116 = scmp.eq.s32.totalorder %s22, 0
      %p117 = por %p115, %p116
      %p118 = scmp.le.s32.totalorder 1, %s16
      %p119 = scmp.lt.s32.totalorder %s16, 3
      %p120 = pnand %p118, %p119
      %p121 = pneg %p120
      // Predicated region
      $region9: #{tpu_custom_call.1} parent=5 // pred_check
        _
      $region10: #{tpu_custom_call.1} parent=5 // pred_check_branch
        %123 = sbr.rel (%p120) target = $region12
      $region11: #{tpu_custom_call.1} parent=5 // pred_region
        %s124 = ssub.s32 %s16, 1
        // Predicated region
        $region13: #{tpu_custom_call.1} parent=11 // pred_check
          %p125 = pneg %p63
        $region14: #{tpu_custom_call.1} parent=11 // pred_check_branch
          %127 = sbr.rel (%p125) target = $region16
        $region15: #{tpu_custom_call.1} parent=11 // pred_region
          %s129 = ssub.s32 2048, 2048
          %130 = vsyncadd [#allocation6], %s129
          %s131 = sshll.u32 [#allocation5], 4
          %s132 = int_to_ptr.vmem [resolvable:$true] %s131
          %137 = dma.hbm_to_vmem [thread:$0]  %s1, 2048, %s132, [#allocation6], 64, 64, 4
        $region16: #{tpu_custom_call.1} parent=11 // pred_fallthru
          _
        // Predicated region
        $region17: #{tpu_custom_call.1} parent=11 // pred_check
          %p138 = pneg %p84
        $region18: #{tpu_custom_call.1} parent=11 // pred_check_branch
          %140 = sbr.rel (%p138) target = $region20
        $region19: #{tpu_custom_call.1} parent=11 // pred_region
          _
        $region20: #{tpu_custom_call.1} parent=11 // pred_fallthru
          _
      $region12: #{tpu_custom_call.1} parent=5 // pred_fallthru
        _
      %p141 = scmp.lt.s32.totalorder %s16, 2
      // Predicated region
      $region21: #{tpu_custom_call.1} parent=5 // pred_check
        %p142 = pneg %p141
      $region22: #{tpu_custom_call.1} parent=5 // pred_check_branch
        %144 = sbr.rel (%p142) target = $region24
      $region23: #{tpu_custom_call.1} parent=5 // pred_region
        // Predicated region
        $region25: #{tpu_custom_call.1} parent=23 // pred_check
          %p145 = pneg %p36
        $region26: #{tpu_custom_call.1} parent=23 // pred_check_branch
          %147 = sbr.rel (%p145) target = $region28
        $region27: #{tpu_custom_call.1} parent=23 // pred_region
          %s148 = sand.u32 %s26, 1
          %s149 = scalar_lea.sflag [#allocation3], %s148
          %s150 = sand.u32 %s26, 1
          %s151 = smul.addr %s150, 128
          %s152 = scalar_lea.vmem [#allocation2], %s151
          %s153 = smul.u32 8, %s16
          %s155 = ssub.s32 2048, 2048
          %156 = vsyncadd %s149, %s155
          %s157 = smul.addr %s153, 2
          %s158 = smul.addr %s157, 128
          %s159 = scalar_lea.hbm %s0, %s158
          %s160 = sshll.u32 %s152, 4
          %s161 = int_to_ptr.vmem [resolvable:$true] %s160
          %166 = dma.hbm_to_vmem [thread:$0]  %s159, 2048, %s161, %s149, 256, 256, 16
        $region28: #{tpu_custom_call.1} parent=23 // pred_fallthru
          _
      $region24: #{tpu_custom_call.1} parent=5 // pred_fallthru
        _
      %p167 = scmp.le.s32.totalorder 1, %s16
      %p168 = scmp.lt.s32.totalorder %s16, 3
      %p169 = pnand %p167, %p168
      %p170 = pneg %p169
      // Predicated region
      $region29: #{tpu_custom_call.1} parent=5 // pred_check
        _
      $region30: #{tpu_custom_call.1} parent=5 // pred_check_branch
        %172 = sbr.rel (%p169) target = $region32
      $region31: #{tpu_custom_call.1} parent=5 // pred_region
        %s173 = ssub.s32 %s16, 1
        %s174 = sand.u32 %s29, 1
        %s175 = scalar_lea.sflag [#allocation3], %s174
        %s176 = sand.u32 %s29, 1
        %s177 = smul.addr %s176, 128
        %s178 = scalar_lea.vmem [#allocation2], %s177
        // Predicated region
        $region33: #{tpu_custom_call.1} parent=31 // pred_check
          %p179 = pneg %p42
        $region34: #{tpu_custom_call.1} parent=31 // pred_check_branch
          %181 = sbr.rel (%p179) target = $region36
        $region35: #{tpu_custom_call.1} parent=31 // pred_region
          %182 = dma.done %s175, 2048
        $region36: #{tpu_custom_call.1} parent=31 // pred_fallthru
          _
        // Predicated region
        $region37: #{tpu_custom_call.1} parent=31 // pred_check
          %p183 = pneg %p63
        $region38: #{tpu_custom_call.1} parent=31 // pred_check_branch
          %185 = sbr.rel (%p183) target = $region40
        $region39: #{tpu_custom_call.1} parent=31 // pred_region
          %186 = dma.done [#allocation6], 2048
        $region40: #{tpu_custom_call.1} parent=31 // pred_fallthru
          _
        %s187 = sand.u32 %s29, 1
        %s188 = scalar_lea.sflag [#allocation3], %s187
        %s189 = sand.u32 %s29, 1
        %s190 = smul.addr %s189, 128
        %s191 = scalar_lea.vmem [#allocation2], %s190
        %p192 = pneg %p42
        %p193 = pneg %p39
        %p194 = pneg %p63
        %p195 = pneg %p60
        %p196 = pneg %p84
        %p197 = pneg %p81
        %p198 = pneg %p110
        %p199 = pneg %p107
        %s200 = sand.u32 %s97, 1
        %s201 = scalar_lea.sflag [#allocation4], %s200
        %s202 = sand.u32 %s97, 1
        %s203 = smul.addr %s202, 64
        %s204 = scalar_lea.vmem [#allocation7], %s203
        %s205 = smul.u32 8, %s21
        %s206 = smul.u32 8, %s21
        %v208 = vld [vmem:[%s178] sm:$0xff]
        %v209 = vld [vmem:[%s178 + $0x8] sm:$0xff]
        %v210 = vld [vmem:[%s178 + $0x10] sm:$0xff]
        %v211 = vld [vmem:[%s178 + $0x18] sm:$0xff]
        %v212 = vld [vmem:[%s178 + $0x20] sm:$0xff]
        %v213 = vld [vmem:[%s178 + $0x28] sm:$0xff]
        %v214 = vld [vmem:[%s178 + $0x30] sm:$0xff]
        %v215 = vld [vmem:[%s178 + $0x38] sm:$0xff]
        %v216 = vld [vmem:[%s178 + $0x40] sm:$0xff]
        %v217 = vld [vmem:[%s178 + $0x48] sm:$0xff]
        %v218 = vld [vmem:[%s178 + $0x50] sm:$0xff]
        %v219 = vld [vmem:[%s178 + $0x58] sm:$0xff]
        %v220 = vld [vmem:[%s178 + $0x60] sm:$0xff]
        %v221 = vld [vmem:[%s178 + $0x68] sm:$0xff]
        %v222 = vld [vmem:[%s178 + $0x70] sm:$0xff]
        %v223 = vld [vmem:[%s178 + $0x78] sm:$0xff]
        %v224 = vmul.f32 %v208, %v208
        %v225 = vmul.f32 %v209, %v209
        %v226 = vmul.f32 %v210, %v210
        %v227 = vmul.f32 %v211, %v211
        %v228 = vmul.f32 %v212, %v212
        %v229 = vmul.f32 %v213, %v213
        %v230 = vmul.f32 %v214, %v214
        %v231 = vmul.f32 %v215, %v215
        %v232 = vmul.f32 %v216, %v216
        %v233 = vmul.f32 %v217, %v217
        %v234 = vmul.f32 %v218, %v218
        %v235 = vmul.f32 %v219, %v219
        %v236 = vmul.f32 %v220, %v220
        %v237 = vmul.f32 %v221, %v221
        %v238 = vmul.f32 %v222, %v222
        %v239 = vmul.f32 %v223, %v223
        %v240 = vadd.f32 %v224, %v225
        %241 = vadd.xlane.f32.xlu0 %v240
        %v242 = vpop.xlane.xlu0 %241
        %v243 = vadd.f32 %v226, %v227
        %244 = vadd.xlane.f32.xlu0 %v243
        %v245 = vpop.xlane.xlu0 %244
        %v246 = vadd.f32 %v228, %v229
        %247 = vadd.xlane.f32.xlu0 %v246
        %v248 = vpop.xlane.xlu0 %247
        %v249 = vadd.f32 %v230, %v231
        %250 = vadd.xlane.f32.xlu0 %v249
        %v251 = vpop.xlane.xlu0 %250
        %v252 = vadd.f32 %v232, %v233
        %253 = vadd.xlane.f32.xlu0 %v252
        %v254 = vpop.xlane.xlu0 %253
        %v255 = vadd.f32 %v234, %v235
        %256 = vadd.xlane.f32.xlu0 %v255
        %v257 = vpop.xlane.xlu0 %256
        %v258 = vadd.f32 %v236, %v237
        %259 = vadd.xlane.f32.xlu0 %v258
        %v260 = vpop.xlane.xlu0 %259
        %v261 = vadd.f32 %v238, %v239
        %262 = vadd.xlane.f32.xlu0 %v261
        %v263 = vpop.xlane.xlu0 %262
        %v264 = vrsqrt.pop %v242
        %v265 = vmul.f32 %v242, %v264
        %vm266 = vcmp.eq.f32.partialorder %v242, inf
        %v267 = vsel %vm266, %v242, %v265
        %vm268 = vcmp.eq.f32.partialorder %v242, 0.0
        %v269 = vand.u32 %v242, 2147483648
        %v270 = vsel %vm268, %v269, %v267
        %v271 = vrsqrt.pop %v245
        %v272 = vmul.f32 %v245, %v271
        %vm273 = vcmp.eq.f32.partialorder %v245, inf
        %v274 = vsel %vm273, %v245, %v272
        %vm275 = vcmp.eq.f32.partialorder %v245, 0.0
        %v276 = vand.u32 %v245, 2147483648
        %v277 = vsel %vm275, %v276, %v274
        %v278 = vrsqrt.pop %v248
        %v279 = vmul.f32 %v248, %v278
        %vm280 = vcmp.eq.f32.partialorder %v248, inf
        %v281 = vsel %vm280, %v248, %v279
        %vm282 = vcmp.eq.f32.partialorder %v248, 0.0
        %v283 = vand.u32 %v248, 2147483648
        %v284 = vsel %vm282, %v283, %v281
        %v285 = vrsqrt.pop %v251
        %v286 = vmul.f32 %v251, %v285
        %vm287 = vcmp.eq.f32.partialorder %v251, inf
        %v288 = vsel %vm287, %v251, %v286
        %vm289 = vcmp.eq.f32.partialorder %v251, 0.0
        %v290 = vand.u32 %v251, 2147483648
        %v291 = vsel %vm289, %v290, %v288
        %v292 = vrsqrt.pop %v254
        %v293 = vmul.f32 %v254, %v292
        %vm294 = vcmp.eq.f32.partialorder %v254, inf
        %v295 = vsel %vm294, %v254, %v293
        %vm296 = vcmp.eq.f32.partialorder %v254, 0.0
        %v297 = vand.u32 %v254, 2147483648
        %v298 = vsel %vm296, %v297, %v295
        %v299 = vrsqrt.pop %v257
        %v300 = vmul.f32 %v257, %v299
        %vm301 = vcmp.eq.f32.partialorder %v257, inf
        %v302 = vsel %vm301, %v257, %v300
        %vm303 = vcmp.eq.f32.partialorder %v257, 0.0
        %v304 = vand.u32 %v257, 2147483648
        %v305 = vsel %vm303, %v304, %v302
        %v306 = vrsqrt.pop %v260
        %v307 = vmul.f32 %v260, %v306
        %vm308 = vcmp.eq.f32.partialorder %v260, inf
        %v309 = vsel %vm308, %v260, %v307
        %vm310 = vcmp.eq.f32.partialorder %v260, 0.0
        %v311 = vand.u32 %v260, 2147483648
        %v312 = vsel %vm310, %v311, %v309
        %v313 = vrsqrt.pop %v263
        %v314 = vmul.f32 %v263, %v313
        %vm315 = vcmp.eq.f32.partialorder %v263, inf
        %v316 = vsel %vm315, %v263, %v314
        %vm317 = vcmp.eq.f32.partialorder %v263, 0.0
        %v318 = vand.u32 %v263, 2147483648
        %v319 = vsel %vm317, %v318, %v316
        %v320 = vmax.f32 %v270, 1e-15
        %v321 = vmax.f32 %v277, 1e-15
        %v322 = vmax.f32 %v284, 1e-15
        %v323 = vmax.f32 %v291, 1e-15
        %v324 = vmax.f32 %v298, 1e-15
        %v325 = vmax.f32 %v305, 1e-15
        %v326 = vmax.f32 %v312, 1e-15
        %v327 = vmax.f32 %v319, 1e-15
        %v328 = vpack.c.bf16 %v210, %v208
        %v329 = vpack.c.bf16 %v211, %v209
        %v330 = vpack.c.bf16 %v214, %v212
        %v331 = vpack.c.bf16 %v215, %v213
        %v332 = vpack.c.bf16 %v218, %v216
        %v333 = vpack.c.bf16 %v219, %v217
        %v334 = vpack.c.bf16 %v222, %v220
        %v335 = vpack.c.bf16 %v223, %v221
        %v336 = vld [vmem:[#allocation5] sm:$0xf]
        %v337 = vld [vmem:[#allocation5 + $0x4] sm:$0xf]
        %v338 = vld [vmem:[#allocation5 + $0x8] sm:$0xf]
        %v339 = vld [vmem:[#allocation5 + $0xc] sm:$0xf]
        %v340 = vld [vmem:[#allocation5 + $0x10] sm:$0xf]
        %v341 = vld [vmem:[#allocation5 + $0x14] sm:$0xf]
        %v342 = vld [vmem:[#allocation5 + $0x18] sm:$0xf]
        %v343 = vld [vmem:[#allocation5 + $0x1c] sm:$0xf]
        %v344 = vld [vmem:[#allocation5 + $0x20] sm:$0xf]
        %v345 = vld [vmem:[#allocation5 + $0x24] sm:$0xf]
        %v346 = vld [vmem:[#allocation5 + $0x28] sm:$0xf]
        %v347 = vld [vmem:[#allocation5 + $0x2c] sm:$0xf]
        %v348 = vld [vmem:[#allocation5 + $0x30] sm:$0xf]
        %v349 = vld [vmem:[#allocation5 + $0x34] sm:$0xf]
        %v350 = vld [vmem:[#allocation5 + $0x38] sm:$0xf]
        %v351 = vld [vmem:[#allocation5 + $0x3c] sm:$0xf]
        %v352 = vld [vmem:[#allocation5 + $0x40] sm:$0xf]
        %v353 = vld [vmem:[#allocation5 + $0x44] sm:$0xf]
        %v354 = vld [vmem:[#allocation5 + $0x48] sm:$0xf]
        %v355 = vld [vmem:[#allocation5 + $0x4c] sm:$0xf]
        %v356 = vld [vmem:[#allocation5 + $0x50] sm:$0xf]
        %v357 = vld [vmem:[#allocation5 + $0x54] sm:$0xf]
        %v358 = vld [vmem:[#allocation5 + $0x58] sm:$0xf]
        %v359 = vld [vmem:[#allocation5 + $0x5c] sm:$0xf]
        %v360 = vld [vmem:[#allocation5 + $0x60] sm:$0xf]
        %v361 = vld [vmem:[#allocation5 + $0x64] sm:$0xf]
        %v362 = vld [vmem:[#allocation5 + $0x68] sm:$0xf]
        %v363 = vld [vmem:[#allocation5 + $0x6c] sm:$0xf]
        %v364 = vld [vmem:[#allocation5 + $0x70] sm:$0xf]
        %v365 = vld [vmem:[#allocation5 + $0x74] sm:$0xf]
        %v366 = vld [vmem:[#allocation5 + $0x78] sm:$0xf]
        %v367 = vld [vmem:[#allocation5 + $0x7c] sm:$0xf]
        %v400 = vunpack.c.l.b16 %v336
        %v401 = vunpack.c.l.b16 %v337
        %v402 = vunpack.c.l.b16 %v338
        %v403 = vunpack.c.l.b16 %v339
        %v404 = vunpack.c.l.b16 %v340
        %v405 = vunpack.c.l.b16 %v341
        %v406 = vunpack.c.l.b16 %v342
        %v407 = vunpack.c.l.b16 %v343
        %v408 = vunpack.c.l.b16 %v344
        %v409 = vunpack.c.l.b16 %v345
        %v410 = vunpack.c.l.b16 %v346
        %v411 = vunpack.c.l.b16 %v347
        %v412 = vunpack.c.l.b16 %v348
        %v413 = vunpack.c.l.b16 %v349
        %v414 = vunpack.c.l.b16 %v350
        %v415 = vunpack.c.l.b16 %v351
        %v416 = vunpack.c.l.b16 %v352
        %v417 = vunpack.c.l.b16 %v353
        %v418 = vunpack.c.l.b16 %v354
        %v419 = vunpack.c.l.b16 %v355
        %v420 = vunpack.c.l.b16 %v356
        %v421 = vunpack.c.l.b16 %v357
        %v422 = vunpack.c.l.b16 %v358
        %v423 = vunpack.c.l.b16 %v359
        %v424 = vunpack.c.l.b16 %v360
        %v425 = vunpack.c.l.b16 %v361
        %v426 = vunpack.c.l.b16 %v362
        %v427 = vunpack.c.l.b16 %v363
        %v428 = vunpack.c.l.b16 %v364
        %v429 = vunpack.c.l.b16 %v365
        %v430 = vunpack.c.l.b16 %v366
        %v431 = vunpack.c.l.b16 %v367
        %v432 = vpack.c.b16 %v401, %v400
        %v433 = vpack.c.b16 %v403, %v402
        %v434 = vpack.c.b16 %v405, %v404
        %v435 = vpack.c.b16 %v407, %v406
        %v436 = vpack.c.b16 %v409, %v408
        %v437 = vpack.c.b16 %v411, %v410
        %v438 = vpack.c.b16 %v413, %v412
        %v439 = vpack.c.b16 %v415, %v414
        %v440 = vpack.c.b16 %v417, %v416
        %v441 = vpack.c.b16 %v419, %v418
        %v442 = vpack.c.b16 %v421, %v420
        %v443 = vpack.c.b16 %v423, %v422
        %v444 = vpack.c.b16 %v425, %v424
        %v445 = vpack.c.b16 %v427, %v426
        %v446 = vpack.c.b16 %v429, %v428
        %v447 = vpack.c.b16 %v431, %v430
        %464 = vmatprep.subr.bf16.mxu0 0
        %465 = vmatpush1.bf16.msra.mxu0 %v432
        %466 = vmatprep.subr.bf16.mxu0 0
        %467 = vmatpush1.bf16.msra.mxu0 %v433
        %468 = vmatprep.subr.bf16.mxu0 0
        %469 = vmatpush1.bf16.msra.mxu0 %v434
        %470 = vmatprep.subr.bf16.mxu0 0
        %471 = vmatpush1.bf16.msra.mxu0 %v435
        %472 = vmatprep.subr.bf16.mxu0 0
        %473 = vmatpush1.bf16.msra.mxu0 %v436
        %474 = vmatprep.subr.bf16.mxu0 0
        %475 = vmatpush1.bf16.msra.mxu0 %v437
        %476 = vmatprep.subr.bf16.mxu0 0
        %477 = vmatpush1.bf16.msra.mxu0 %v438
        %478 = vmatprep.subr.bf16.mxu0 0
        %479 = vmatpush1.bf16.msra.mxu0 %v439
        %480 = vmatprep.subr.bf16.mxu0 0
        %481 = vmatpush1.bf16.msra.mxu0 %v440
        %482 = vmatprep.subr.bf16.mxu0 0
        %483 = vmatpush1.bf16.msra.mxu0 %v441
        %484 = vmatprep.subr.bf16.mxu0 0
        %485 = vmatpush1.bf16.msra.mxu0 %v442
        %486 = vmatprep.subr.bf16.mxu0 0
        %487 = vmatpush1.bf16.msra.mxu0 %v443
        %488 = vmatprep.subr.bf16.mxu0 0
        %489 = vmatpush1.bf16.msra.mxu0 %v444
        %490 = vmatprep.subr.bf16.mxu0 0
        %491 = vmatpush1.bf16.msra.mxu0 %v445
        %492 = vmatprep.subr.bf16.mxu0 0
        %493 = vmatpush1.bf16.msra.mxu0 %v446
        %494 = vmatprep.subr.bf16.mxu0 0
        %495 = vmatpush1.bf16.msra.mxu0 %v447
        %496 = vmatprep.mubr.bf16.mxu0 %v329
        %497 = vmatmul.mubr.bf16.gmra.mrb[0].mxu0 %v328
        %v498 = vpop.f32.mrb[0].mxu0
        %v499 = vadd.f32 0.0, %v498
        %v500 = vpop.f32.mrb[0].mxu0
        %v501 = vpop.f32.mrb[0].mxu0
        %v502 = vadd.f32 0.0, %v501
        %v503 = vpop.f32.mrb[0].mxu0
        %504 = vmatprep.mubr.bf16.mxu0 %v331
        %505 = vmatmul.mubr.bf16.gmra.mrb[0].mxu0 %v330
        %v506 = vpop.f32.mrb[0].mxu0
        %v507 = vadd.f32 0.0, %v506
        %v508 = vpop.f32.mrb[0].mxu0
        %v509 = vpop.f32.mrb[0].mxu0
        %v510 = vadd.f32 0.0, %v509
        %v511 = vpop.f32.mrb[0].mxu0
        %512 = vmatprep.mubr.bf16.mxu0 %v333
        %513 = vmatmul.mubr.bf16.gmra.mrb[0].mxu0 %v332
        %v514 = vpop.f32.mrb[0].mxu0
        %v515 = vadd.f32 0.0, %v514
        %v516 = vpop.f32.mrb[0].mxu0
        %v517 = vpop.f32.mrb[0].mxu0
        %v518 = vadd.f32 0.0, %v517
        %v519 = vpop.f32.mrb[0].mxu0
        %520 = vmatprep.mubr.bf16.mxu0 %v335
        %521 = vmatmul.mubr.bf16.gmra.mrb[0].mxu0 %v334
        %v522 = vpop.f32.mrb[0].mxu0
        %v523 = vadd.f32 0.0, %v522
        %v524 = vpop.f32.mrb[0].mxu0
        %v525 = vpop.f32.mrb[0].mxu0
        %v526 = vadd.f32 0.0, %v525
        %v527 = vpop.f32.mrb[0].mxu0
        %528 = vdwg.mxu0
        %v529 = vld [vmem:[%s2] sm:$0x1]
        %v530 = vmul.f32 %v499, %v499
        %v531 = vmul.f32 %v502, %v502
        %v532 = vmul.f32 %v507, %v507
        %v533 = vmul.f32 %v510, %v510
        %v534 = vmul.f32 %v515, %v515
        %v535 = vmul.f32 %v518, %v518
        %v536 = vmul.f32 %v523, %v523
        %v537 = vmul.f32 %v526, %v526
        %538 = vadd.xlane.f32.xlu0 %v530
        %v539 = vpop.xlane.xlu0 %538
        %540 = vadd.xlane.f32.xlu0 %v531
        %v541 = vpop.xlane.xlu0 %540
        %542 = vadd.xlane.f32.xlu0 %v532
        %v543 = vpop.xlane.xlu0 %542
        %544 = vadd.xlane.f32.xlu0 %v533
        %v545 = vpop.xlane.xlu0 %544
        %546 = vadd.xlane.f32.xlu0 %v534
        %v547 = vpop.xlane.xlu0 %546
        %548 = vadd.xlane.f32.xlu0 %v535
        %v549 = vpop.xlane.xlu0 %548
        %550 = vadd.xlane.f32.xlu0 %v536
        %v551 = vpop.xlane.xlu0 %550
        %552 = vadd.xlane.f32.xlu0 %v537
        %v553 = vpop.xlane.xlu0 %552
        %v554 = vrsqrt.pop %v539
        %v555 = vmul.f32 %v539, %v554
        %vm556 = vcmp.eq.f32.partialorder %v539, inf
        %v557 = vsel %vm556, %v539, %v555
        %vm558 = vcmp.eq.f32.partialorder %v539, 0.0
        %v559 = vand.u32 %v539, 2147483648
        %v560 = vsel %vm558, %v559, %v557
        %v561 = vrsqrt.pop %v541
        %v562 = vmul.f32 %v541, %v561
        %vm563 = vcmp.eq.f32.partialorder %v541, inf
        %v564 = vsel %vm563, %v541, %v562
        %vm565 = vcmp.eq.f32.partialorder %v541, 0.0
        %v566 = vand.u32 %v541, 2147483648
        %v567 = vsel %vm565, %v566, %v564
        %v568 = vrsqrt.pop %v543
        %v569 = vmul.f32 %v543, %v568
        %vm570 = vcmp.eq.f32.partialorder %v543, inf
        %v571 = vsel %vm570, %v543, %v569
        %vm572 = vcmp.eq.f32.partialorder %v543, 0.0
        %v573 = vand.u32 %v543, 2147483648
        %v574 = vsel %vm572, %v573, %v571
        %v575 = vrsqrt.pop %v545
        %v576 = vmul.f32 %v545, %v575
        %vm577 = vcmp.eq.f32.partialorder %v545, inf
        %v578 = vsel %vm577, %v545, %v576
        %vm579 = vcmp.eq.f32.partialorder %v545, 0.0
        %v580 = vand.u32 %v545, 2147483648
        %v581 = vsel %vm579, %v580, %v578
        %v582 = vrsqrt.pop %v547
        %v583 = vmul.f32 %v547, %v582
        %vm584 = vcmp.eq.f32.partialorder %v547, inf
        %v585 = vsel %vm584, %v547, %v583
        %vm586 = vcmp.eq.f32.partialorder %v547, 0.0
        %v587 = vand.u32 %v547, 2147483648
        %v588 = vsel %vm586, %v587, %v585
        %v589 = vrsqrt.pop %v549
        %v590 = vmul.f32 %v549, %v589
        %vm591 = vcmp.eq.f32.partialorder %v549, inf
        %v592 = vsel %vm591, %v549, %v590
        %vm593 = vcmp.eq.f32.partialorder %v549, 0.0
        %v594 = vand.u32 %v549, 2147483648
        %v595 = vsel %vm593, %v594, %v592
        %v596 = vrsqrt.pop %v551
        %v597 = vmul.f32 %v551, %v596
        %vm598 = vcmp.eq.f32.partialorder %v551, inf
        %v599 = vsel %vm598, %v551, %v597
        %vm600 = vcmp.eq.f32.partialorder %v551, 0.0
        %v601 = vand.u32 %v551, 2147483648
        %v602 = vsel %vm600, %v601, %v599
        %v603 = vrsqrt.pop %v553
        %v604 = vmul.f32 %v553, %v603
        %vm605 = vcmp.eq.f32.partialorder %v553, inf
        %v606 = vsel %vm605, %v553, %v604
        %vm607 = vcmp.eq.f32.partialorder %v553, 0.0
        %v608 = vand.u32 %v553, 2147483648
        %v609 = vsel %vm607, %v608, %v606
        %v610 = vmax.f32 %v560, 1e-15
        %v611 = vmax.f32 %v567, 1e-15
        %v612 = vmax.f32 %v574, 1e-15
        %v613 = vmax.f32 %v581, 1e-15
        %v614 = vmax.f32 %v588, 1e-15
        %v615 = vmax.f32 %v595, 1e-15
        %v616 = vmax.f32 %v602, 1e-15
        %v617 = vmax.f32 %v609, 1e-15
        %v618 = vrcp.pop %v320
        %v619 = vmul.f32 %v610, %v618
        %v620 = vrcp.pop %v321
        %v621 = vmul.f32 %v611, %v620
        %v622 = vrcp.pop %v322
        %v623 = vmul.f32 %v612, %v622
        %v624 = vrcp.pop %v323
        %v625 = vmul.f32 %v613, %v624
        %v626 = vrcp.pop %v324
        %v627 = vmul.f32 %v614, %v626
        %v628 = vrcp.pop %v325
        %v629 = vmul.f32 %v615, %v628
        %v630 = vrcp.pop %v326
        %v631 = vmul.f32 %v616, %v630
        %v632 = vrcp.pop %v327
        %v633 = vmul.f32 %v617, %v632
        %v634 = vmax.f32 %v320, -0.9999999
        %v635 = vmax.f32 %v321, -0.9999999
        %v636 = vmax.f32 %v322, -0.9999999
        %v637 = vmax.f32 %v323, -0.9999999
        %v638 = vmax.f32 %v324, -0.9999999
        %v639 = vmax.f32 %v325, -0.9999999
        %v640 = vmax.f32 %v326, -0.9999999
        %v641 = vmax.f32 %v327, -0.9999999
        %v642 = vmin.f32 %v634, 0.9999999
        %v643 = vmin.f32 %v635, 0.9999999
        %v644 = vmin.f32 %v636, 0.9999999
        %v645 = vmin.f32 %v637, 0.9999999
        %v646 = vmin.f32 %v638, 0.9999999
        %v647 = vmin.f32 %v639, 0.9999999
        %v648 = vmin.f32 %v640, 0.9999999
        %v649 = vmin.f32 %v641, 0.9999999
        %v650 = vadd.f32 %v642, 1.0
        %v651 = vadd.f32 %v643, 1.0
        %v652 = vadd.f32 %v644, 1.0
        %v653 = vadd.f32 %v645, 1.0
        %v654 = vadd.f32 %v646, 1.0
        %v655 = vadd.f32 %v647, 1.0
        %v656 = vadd.f32 %v648, 1.0
        %v657 = vadd.f32 %v649, 1.0
        %v658 = vsub.f32 1.0, %v642
        %v659 = vsub.f32 1.0, %v643
        %v660 = vsub.f32 1.0, %v644
        %v661 = vsub.f32 1.0, %v645
        %v662 = vsub.f32 1.0, %v646
        %v663 = vsub.f32 1.0, %v647
        %v664 = vsub.f32 1.0, %v648
        %v665 = vsub.f32 1.0, %v649
        %v666 = vrcp.pop %v658
        %v667 = vmul.f32 %v650, %v666
        %v668 = vrcp.pop %v659
        %v669 = vmul.f32 %v651, %v668
        %v670 = vrcp.pop %v660
        %v671 = vmul.f32 %v652, %v670
        %v672 = vrcp.pop %v661
        %v673 = vmul.f32 %v653, %v672
        %v674 = vrcp.pop %v662
        %v675 = vmul.f32 %v654, %v674
        %v676 = vrcp.pop %v663
        %v677 = vmul.f32 %v655, %v676
        %v678 = vrcp.pop %v664
        %v679 = vmul.f32 %v656, %v678
        %v680 = vrcp.pop %v665
        %v681 = vmul.f32 %v657, %v680
        %v682 = vlog2.pop %v667
        %v683 = vmul.f32 %v682, 0.6931472
        %v684 = vlog2.pop %v669
        %v685 = vmul.f32 %v684, 0.6931472
        %v686 = vlog2.pop %v671
        %v687 = vmul.f32 %v686, 0.6931472
        %v688 = vlog2.pop %v673
        %v689 = vmul.f32 %v688, 0.6931472
        %v690 = vlog2.pop %v675
        %v691 = vmul.f32 %v690, 0.6931472
        %v692 = vlog2.pop %v677
        %v693 = vmul.f32 %v692, 0.6931472
        %v694 = vlog2.pop %v679
        %v695 = vmul.f32 %v694, 0.6931472
        %v696 = vlog2.pop %v681
        %v697 = vmul.f32 %v696, 0.6931472
        %v698 = vmul.f32 %v683, 0.5
        %v699 = vmul.f32 %v685, 0.5
        %v700 = vmul.f32 %v687, 0.5
        %v701 = vmul.f32 %v689, 0.5
        %v702 = vmul.f32 %v691, 0.5
        %v703 = vmul.f32 %v693, 0.5
        %v704 = vmul.f32 %v695, 0.5
        %v705 = vmul.f32 %v697, 0.5
        %v706 = vmul.f32 %v619, %v698
        %v707 = vmul.f32 %v621, %v699
        %v708 = vmul.f32 %v623, %v700
        %v709 = vmul.f32 %v625, %v701
        %v710 = vmul.f32 %v627, %v702
        %v711 = vmul.f32 %v629, %v703
        %v712 = vmul.f32 %v631, %v704
        %v713 = vmul.f32 %v633, %v705
        %v714 = vtanh.pop %v706
        %v715 = vtanh.pop %v707
        %v716 = vtanh.pop %v708
        %v717 = vtanh.pop %v709
        %v718 = vtanh.pop %v710
        %v719 = vtanh.pop %v711
        %v720 = vtanh.pop %v712
        %v721 = vtanh.pop %v713
        %vm722 = vcmp.eq.f32.partialorder %v539, 0.0
        %vm723 = vcmp.eq.f32.partialorder %v541, 0.0
        %vm724 = vcmp.eq.f32.partialorder %v543, 0.0
        %vm725 = vcmp.eq.f32.partialorder %v545, 0.0
        %vm726 = vcmp.eq.f32.partialorder %v547, 0.0
        %vm727 = vcmp.eq.f32.partialorder %v549, 0.0
        %vm728 = vcmp.eq.f32.partialorder %v551, 0.0
        %vm729 = vcmp.eq.f32.partialorder %v553, 0.0
        %v730 = vrcp.pop %v610
        %v731 = vmul.f32 %v714, %v730
        %v732 = vrcp.pop %v611
        %v733 = vmul.f32 %v715, %v732
        %v734 = vrcp.pop %v612
        %v735 = vmul.f32 %v716, %v734
        %v736 = vrcp.pop %v613
        %v737 = vmul.f32 %v717, %v736
        %v738 = vrcp.pop %v614
        %v739 = vmul.f32 %v718, %v738
        %v740 = vrcp.pop %v615
        %v741 = vmul.f32 %v719, %v740
        %v742 = vrcp.pop %v616
        %v743 = vmul.f32 %v720, %v742
        %v744 = vrcp.pop %v617
        %v745 = vmul.f32 %v721, %v744
        %v746 = vsel %vm722, 0.0, %v731
        %v747 = vsel %vm723, 0.0, %v733
        %v748 = vsel %vm724, 0.0, %v735
        %v749 = vsel %vm725, 0.0, %v737
        %v750 = vsel %vm726, 0.0, %v739
        %v751 = vsel %vm727, 0.0, %v741
        %v752 = vsel %vm728, 0.0, %v743
        %v753 = vsel %vm729, 0.0, %v745
        %v754 = vmul.f32 %v746, %v610
        %v755 = vmul.f32 %v747, %v611
        %v756 = vmul.f32 %v748, %v612
        %v757 = vmul.f32 %v749, %v613
        %v758 = vmul.f32 %v750, %v614
        %v759 = vmul.f32 %v751, %v615
        %v760 = vmul.f32 %v752, %v616
        %v761 = vmul.f32 %v753, %v617
        %v762 = vmax.f32 %v754, 1e-15
        %v763 = vmax.f32 %v755, 1e-15
        %v764 = vmax.f32 %v756, 1e-15
        %v765 = vmax.f32 %v757, 1e-15
        %v766 = vmax.f32 %v758, 1e-15
        %v767 = vmax.f32 %v759, 1e-15
        %v768 = vmax.f32 %v760, 1e-15
        %v769 = vmax.f32 %v761, 1e-15
        %vm770 = vcmp.gt.f32.partialorder %v762, 0.996
        %vm771 = vcmp.gt.f32.partialorder %v763, 0.996
        %vm772 = vcmp.gt.f32.partialorder %v764, 0.996
        %vm773 = vcmp.gt.f32.partialorder %v765, 0.996
        %vm774 = vcmp.gt.f32.partialorder %v766, 0.996
        %vm775 = vcmp.gt.f32.partialorder %v767, 0.996
        %vm776 = vcmp.gt.f32.partialorder %v768, 0.996
        %vm777 = vcmp.gt.f32.partialorder %v769, 0.996
        %v778 = vrcp.pop %v762
        %v779 = vmul.f32 0.996, %v778
        %v780 = vrcp.pop %v763
        %v781 = vmul.f32 0.996, %v780
        %v782 = vrcp.pop %v764
        %v783 = vmul.f32 0.996, %v782
        %v784 = vrcp.pop %v765
        %v785 = vmul.f32 0.996, %v784
        %v786 = vrcp.pop %v766
        %v787 = vmul.f32 0.996, %v786
        %v788 = vrcp.pop %v767
        %v789 = vmul.f32 0.996, %v788
        %v790 = vrcp.pop %v768
        %v791 = vmul.f32 0.996, %v790
        %v792 = vrcp.pop %v769
        %v793 = vmul.f32 0.996, %v792
        %v794 = vmul.f32 %v746, %v779
        %v795 = vmul.f32 %v747, %v781
        %v796 = vmul.f32 %v748, %v783
        %v797 = vmul.f32 %v749, %v785
        %v798 = vmul.f32 %v750, %v787
        %v799 = vmul.f32 %v751, %v789
        %v800 = vmul.f32 %v752, %v791
        %v801 = vmul.f32 %v753, %v793
        %v802 = vsel %vm770, %v794, %v746
        %v803 = vsel %vm771, %v795, %v747
        %v804 = vsel %vm772, %v796, %v748
        %v805 = vsel %vm773, %v797, %v749
        %v806 = vsel %vm774, %v798, %v750
        %v807 = vsel %vm775, %v799, %v751
        %v808 = vsel %vm776, %v800, %v752
        %v809 = vsel %vm777, %v801, %v753
        %v810 = vmul.f32 %v802, %v499
        %v811 = vmul.f32 %v803, %v502
        %v812 = vmul.f32 %v804, %v507
        %v813 = vmul.f32 %v805, %v510
        %v814 = vmul.f32 %v806, %v515
        %v815 = vmul.f32 %v807, %v518
        %v816 = vmul.f32 %v808, %v523
        %v817 = vmul.f32 %v809, %v526
        %v818 = vmul.f32 %v810, %v810
        %v819 = vmul.f32 %v811, %v811
        %v820 = vmul.f32 %v812, %v812
        %v821 = vmul.f32 %v813, %v813
        %v822 = vmul.f32 %v814, %v814
        %v823 = vmul.f32 %v815, %v815
        %v824 = vmul.f32 %v816, %v816
        %v825 = vmul.f32 %v817, %v817
        %826 = vadd.xlane.f32.xlu0 %v818
        %v827 = vpop.xlane.xlu0 %826
        %828 = vadd.xlane.f32.xlu0 %v819
        %v829 = vpop.xlane.xlu0 %828
        %830 = vadd.xlane.f32.xlu0 %v820
        %v831 = vpop.xlane.xlu0 %830
        %832 = vadd.xlane.f32.xlu0 %v821
        %v833 = vpop.xlane.xlu0 %832
        %834 = vadd.xlane.f32.xlu0 %v822
        %v835 = vpop.xlane.xlu0 %834
        %836 = vadd.xlane.f32.xlu0 %v823
        %v837 = vpop.xlane.xlu0 %836
        %838 = vadd.xlane.f32.xlu0 %v824
        %v839 = vpop.xlane.xlu0 %838
        %840 = vadd.xlane.f32.xlu0 %v825
        %v841 = vpop.xlane.xlu0 %840
        %v842 = vmul.f32 %v529, %v529
        %vm843 = vcmask 1040384
        %v844 = vsel %vm843, %v842, 0.0
        %845 = vadd.xlane.f32.xlu0 %v844
        %v846 = vpop.xlane.xlu0 %845
        %v848 = vlaneseq
        %v849 = vshrl.u32 %v848, 7
        %v850 = vsub.s32 0, %v849
        %v851 = vrot.slane %v529, %v850
        %v853 = vmul.f32 %v810, %v851
        %v854 = vmul.f32 %v811, %v851
        %v855 = vmul.f32 %v812, %v851
        %v856 = vmul.f32 %v813, %v851
        %v857 = vmul.f32 %v814, %v851
        %v858 = vmul.f32 %v815, %v851
        %v859 = vmul.f32 %v816, %v851
        %v860 = vmul.f32 %v817, %v851
        %861 = vadd.xlane.f32.xlu0 %v853
        %v862 = vpop.xlane.xlu0 %861
        %863 = vadd.xlane.f32.xlu0 %v854
        %v864 = vpop.xlane.xlu0 %863
        %865 = vadd.xlane.f32.xlu0 %v855
        %v866 = vpop.xlane.xlu0 %865
        %867 = vadd.xlane.f32.xlu0 %v856
        %v868 = vpop.xlane.xlu0 %867
        %869 = vadd.xlane.f32.xlu0 %v857
        %v870 = vpop.xlane.xlu0 %869
        %871 = vadd.xlane.f32.xlu0 %v858
        %v872 = vpop.xlane.xlu0 %871
        %873 = vadd.xlane.f32.xlu0 %v859
        %v874 = vpop.xlane.xlu0 %873
        %875 = vadd.xlane.f32.xlu0 %v860
        %v876 = vpop.xlane.xlu0 %875
        %v877 = vmul.f32 %v862, 2.0
        %v878 = vmul.f32 %v864, 2.0
        %v879 = vmul.f32 %v866, 2.0
        %v880 = vmul.f32 %v868, 2.0
        %v881 = vmul.f32 %v870, 2.0
        %v882 = vmul.f32 %v872, 2.0
        %v883 = vmul.f32 %v874, 2.0
        %v884 = vmul.f32 %v876, 2.0
        %v885 = vadd.f32 %v877, 1.0
        %v886 = vadd.f32 %v878, 1.0
        %v887 = vadd.f32 %v879, 1.0
        %v888 = vadd.f32 %v880, 1.0
        %v889 = vadd.f32 %v881, 1.0
        %v890 = vadd.f32 %v882, 1.0
        %v891 = vadd.f32 %v883, 1.0
        %v892 = vadd.f32 %v884, 1.0
        %v893 = vlaneseq
        %v894 = vshrl.u32 %v893, 7
        %v895 = vsub.s32 0, %v894
        %v896 = vrot.slane %v846, %v895
        %v897 = vadd.f32 %v885, %v896
        %v898 = vadd.f32 %v886, %v896
        %v899 = vadd.f32 %v887, %v896
        %v900 = vadd.f32 %v888, %v896
        %v901 = vadd.f32 %v889, %v896
        %v902 = vadd.f32 %v890, %v896
        %v903 = vadd.f32 %v891, %v896
        %v904 = vadd.f32 %v892, %v896
        %v905 = vmul.f32 %v897, %v810
        %v906 = vmul.f32 %v898, %v811
        %v907 = vmul.f32 %v899, %v812
        %v908 = vmul.f32 %v900, %v813
        %v909 = vmul.f32 %v901, %v814
        %v910 = vmul.f32 %v902, %v815
        %v911 = vmul.f32 %v903, %v816
        %v912 = vmul.f32 %v904, %v817
        %v913 = vsub.f32 1.0, %v827
        %v914 = vsub.f32 1.0, %v829
        %v915 = vsub.f32 1.0, %v831
        %v916 = vsub.f32 1.0, %v833
        %v917 = vsub.f32 1.0, %v835
        %v918 = vsub.f32 1.0, %v837
        %v919 = vsub.f32 1.0, %v839
        %v920 = vsub.f32 1.0, %v841
        %v921 = vmul.f32 %v913, %v851
        %v922 = vmul.f32 %v914, %v851
        %v923 = vmul.f32 %v915, %v851
        %v924 = vmul.f32 %v916, %v851
        %v925 = vmul.f32 %v917, %v851
        %v926 = vmul.f32 %v918, %v851
        %v927 = vmul.f32 %v919, %v851
        %v928 = vmul.f32 %v920, %v851
        %v929 = vadd.f32 %v905, %v921
        %v930 = vadd.f32 %v906, %v922
        %v931 = vadd.f32 %v907, %v923
        %v932 = vadd.f32 %v908, %v924
        %v933 = vadd.f32 %v909, %v925
        %v934 = vadd.f32 %v910, %v926
        %v935 = vadd.f32 %v911, %v927
        %v936 = vadd.f32 %v912, %v928
        %v937 = vmul.f32 %v827, %v896
        %v938 = vmul.f32 %v829, %v896
        %v939 = vmul.f32 %v831, %v896
        %v940 = vmul.f32 %v833, %v896
        %v941 = vmul.f32 %v835, %v896
        %v942 = vmul.f32 %v837, %v896
        %v943 = vmul.f32 %v839, %v896
        %v944 = vmul.f32 %v841, %v896
        %v945 = vadd.f32 %v885, %v937
        %v946 = vadd.f32 %v886, %v938
        %v947 = vadd.f32 %v887, %v939
        %v948 = vadd.f32 %v888, %v940
        %v949 = vadd.f32 %v889, %v941
        %v950 = vadd.f32 %v890, %v942
        %v951 = vadd.f32 %v891, %v943
        %v952 = vadd.f32 %v892, %v944
        %v953 = vmax.f32 %v945, 1e-15
        %v954 = vmax.f32 %v946, 1e-15
        %v955 = vmax.f32 %v947, 1e-15
        %v956 = vmax.f32 %v948, 1e-15
        %v957 = vmax.f32 %v949, 1e-15
        %v958 = vmax.f32 %v950, 1e-15
        %v959 = vmax.f32 %v951, 1e-15
        %v960 = vmax.f32 %v952, 1e-15
        %v961 = vrcp.pop %v953
        %v962 = vmul.f32 1.0, %v961
        %v963 = vrcp.pop %v954
        %v964 = vmul.f32 1.0, %v963
        %v965 = vrcp.pop %v955
        %v966 = vmul.f32 1.0, %v965
        %v967 = vrcp.pop %v956
        %v968 = vmul.f32 1.0, %v967
        %v969 = vrcp.pop %v957
        %v970 = vmul.f32 1.0, %v969
        %v971 = vrcp.pop %v958
        %v972 = vmul.f32 1.0, %v971
        %v973 = vrcp.pop %v959
        %v974 = vmul.f32 1.0, %v973
        %v975 = vrcp.pop %v960
        %v976 = vmul.f32 1.0, %v975
        %v977 = vmul.f32 %v929, %v962
        %v978 = vmul.f32 %v930, %v964
        %v979 = vmul.f32 %v931, %v966
        %v980 = vmul.f32 %v932, %v968
        %v981 = vmul.f32 %v933, %v970
        %v982 = vmul.f32 %v934, %v972
        %v983 = vmul.f32 %v935, %v974
        %v984 = vmul.f32 %v936, %v976
        %v985 = vmul.f32 %v977, %v977
        %v986 = vmul.f32 %v978, %v978
        %v987 = vmul.f32 %v979, %v979
        %v988 = vmul.f32 %v980, %v980
        %v989 = vmul.f32 %v981, %v981
        %v990 = vmul.f32 %v982, %v982
        %v991 = vmul.f32 %v983, %v983
        %v992 = vmul.f32 %v984, %v984
        %993 = vadd.xlane.f32.xlu0 %v985
        %v994 = vpop.xlane.xlu0 %993
        %995 = vadd.xlane.f32.xlu0 %v986
        %v996 = vpop.xlane.xlu0 %995
        %997 = vadd.xlane.f32.xlu0 %v987
        %v998 = vpop.xlane.xlu0 %997
        %999 = vadd.xlane.f32.xlu0 %v988
        %v1000 = vpop.xlane.xlu0 %999
        %1001 = vadd.xlane.f32.xlu0 %v989
        %v1002 = vpop.xlane.xlu0 %1001
        %1003 = vadd.xlane.f32.xlu0 %v990
        %v1004 = vpop.xlane.xlu0 %1003
        %1005 = vadd.xlane.f32.xlu0 %v991
        %v1006 = vpop.xlane.xlu0 %1005
        %1007 = vadd.xlane.f32.xlu0 %v992
        %v1008 = vpop.xlane.xlu0 %1007
        %v1009 = vrsqrt.pop %v994
        %v1010 = vmul.f32 %v994, %v1009
        %vm1011 = vcmp.eq.f32.partialorder %v994, inf
        %v1012 = vsel %vm1011, %v994, %v1010
        %vm1013 = vcmp.eq.f32.partialorder %v994, 0.0
        %v1014 = vand.u32 %v994, 2147483648
        %v1015 = vsel %vm1013, %v1014, %v1012
        %v1016 = vrsqrt.pop %v996
        %v1017 = vmul.f32 %v996, %v1016
        %vm1018 = vcmp.eq.f32.partialorder %v996, inf
        %v1019 = vsel %vm1018, %v996, %v1017
        %vm1020 = vcmp.eq.f32.partialorder %v996, 0.0
        %v1021 = vand.u32 %v996, 2147483648
        %v1022 = vsel %vm1020, %v1021, %v1019
        %v1023 = vrsqrt.pop %v998
        %v1024 = vmul.f32 %v998, %v1023
        %vm1025 = vcmp.eq.f32.partialorder %v998, inf
        %v1026 = vsel %vm1025, %v998, %v1024
        %vm1027 = vcmp.eq.f32.partialorder %v998, 0.0
        %v1028 = vand.u32 %v998, 2147483648
        %v1029 = vsel %vm1027, %v1028, %v1026
        %v1030 = vrsqrt.pop %v1000
        %v1031 = vmul.f32 %v1000, %v1030
        %vm1032 = vcmp.eq.f32.partialorder %v1000, inf
        %v1033 = vsel %vm1032, %v1000, %v1031
        %vm1034 = vcmp.eq.f32.partialorder %v1000, 0.0
        %v1035 = vand.u32 %v1000, 2147483648
        %v1036 = vsel %vm1034, %v1035, %v1033
        %v1037 = vrsqrt.pop %v1002
        %v1038 = vmul.f32 %v1002, %v1037
        %vm1039 = vcmp.eq.f32.partialorder %v1002, inf
        %v1040 = vsel %vm1039, %v1002, %v1038
        %vm1041 = vcmp.eq.f32.partialorder %v1002, 0.0
        %v1042 = vand.u32 %v1002, 2147483648
        %v1043 = vsel %vm1041, %v1042, %v1040
        %v1044 = vrsqrt.pop %v1004
        %v1045 = vmul.f32 %v1004, %v1044
        %vm1046 = vcmp.eq.f32.partialorder %v1004, inf
        %v1047 = vsel %vm1046, %v1004, %v1045
        %vm1048 = vcmp.eq.f32.partialorder %v1004, 0.0
        %v1049 = vand.u32 %v1004, 2147483648
        %v1050 = vsel %vm1048, %v1049, %v1047
        %v1051 = vrsqrt.pop %v1006
        %v1052 = vmul.f32 %v1006, %v1051
        %vm1053 = vcmp.eq.f32.partialorder %v1006, inf
        %v1054 = vsel %vm1053, %v1006, %v1052
        %vm1055 = vcmp.eq.f32.partialorder %v1006, 0.0
        %v1056 = vand.u32 %v1006, 2147483648
        %v1057 = vsel %vm1055, %v1056, %v1054
        %v1058 = vrsqrt.pop %v1008
        %v1059 = vmul.f32 %v1008, %v1058
        %vm1060 = vcmp.eq.f32.partialorder %v1008, inf
        %v1061 = vsel %vm1060, %v1008, %v1059
        %vm1062 = vcmp.eq.f32.partialorder %v1008, 0.0
        %v1063 = vand.u32 %v1008, 2147483648
        %v1064 = vsel %vm1062, %v1063, %v1061
        %v1065 = vmax.f32 %v1015, 1e-15
        %v1066 = vmax.f32 %v1022, 1e-15
        %v1067 = vmax.f32 %v1029, 1e-15
        %v1068 = vmax.f32 %v1036, 1e-15
        %v1069 = vmax.f32 %v1043, 1e-15
        %v1070 = vmax.f32 %v1050, 1e-15
        %v1071 = vmax.f32 %v1057, 1e-15
        %v1072 = vmax.f32 %v1064, 1e-15
        %vm1073 = vcmp.gt.f32.partialorder %v1065, 0.996
        %vm1074 = vcmp.gt.f32.partialorder %v1066, 0.996
        %vm1075 = vcmp.gt.f32.partialorder %v1067, 0.996
        %vm1076 = vcmp.gt.f32.partialorder %v1068, 0.996
        %vm1077 = vcmp.gt.f32.partialorder %v1069, 0.996
        %vm1078 = vcmp.gt.f32.partialorder %v1070, 0.996
        %vm1079 = vcmp.gt.f32.partialorder %v1071, 0.996
        %vm1080 = vcmp.gt.f32.partialorder %v1072, 0.996
        %v1081 = vrcp.pop %v1065
        %v1082 = vmul.f32 0.996, %v1081
        %v1083 = vrcp.pop %v1066
        %v1084 = vmul.f32 0.996, %v1083
        %v1085 = vrcp.pop %v1067
        %v1086 = vmul.f32 0.996, %v1085
        %v1087 = vrcp.pop %v1068
        %v1088 = vmul.f32 0.996, %v1087
        %v1089 = vrcp.pop %v1069
        %v1090 = vmul.f32 0.996, %v1089
        %v1091 = vrcp.pop %v1070
        %v1092 = vmul.f32 0.996, %v1091
        %v1093 = vrcp.pop %v1071
        %v1094 = vmul.f32 0.996, %v1093
        %v1095 = vrcp.pop %v1072
        %v1096 = vmul.f32 0.996, %v1095
        %v1097 = vsel %vm1073, %v1082, 1.0
        %v1098 = vsel %vm1074, %v1084, 1.0
        %v1099 = vsel %vm1075, %v1086, 1.0
        %v1100 = vsel %vm1076, %v1088, 1.0
        %v1101 = vsel %vm1077, %v1090, 1.0
        %v1102 = vsel %vm1078, %v1092, 1.0
        %v1103 = vsel %vm1079, %v1094, 1.0
        %v1104 = vsel %vm1080, %v1096, 1.0
        %v1105 = vmul.f32 %v1097, %v977
        %v1106 = vmul.f32 %v1098, %v978
        %v1107 = vmul.f32 %v1099, %v979
        %v1108 = vmul.f32 %v1100, %v980
        %v1109 = vmul.f32 %v1101, %v981
        %v1110 = vmul.f32 %v1102, %v982
        %v1111 = vmul.f32 %v1103, %v983
        %v1112 = vmul.f32 %v1104, %v984
        %v1113 = vmul.f32 %v1105, %v1105
        %v1114 = vmul.f32 %v1106, %v1106
        %v1115 = vmul.f32 %v1107, %v1107
        %v1116 = vmul.f32 %v1108, %v1108
        %v1117 = vmul.f32 %v1109, %v1109
        %v1118 = vmul.f32 %v1110, %v1110
        %v1119 = vmul.f32 %v1111, %v1111
        %v1120 = vmul.f32 %v1112, %v1112
        %1121 = vadd.xlane.f32.xlu0 %v1113
        %v1122 = vpop.xlane.xlu0 %1121
        %1123 = vadd.xlane.f32.xlu0 %v1114
        %v1124 = vpop.xlane.xlu0 %1123
        %1125 = vadd.xlane.f32.xlu0 %v1115
        %v1126 = vpop.xlane.xlu0 %1125
        %1127 = vadd.xlane.f32.xlu0 %v1116
        %v1128 = vpop.xlane.xlu0 %1127
        %1129 = vadd.xlane.f32.xlu0 %v1117
        %v1130 = vpop.xlane.xlu0 %1129
        %1131 = vadd.xlane.f32.xlu0 %v1118
        %v1132 = vpop.xlane.xlu0 %1131
        %1133 = vadd.xlane.f32.xlu0 %v1119
        %v1134 = vpop.xlane.xlu0 %1133
        %1135 = vadd.xlane.f32.xlu0 %v1120
        %v1136 = vpop.xlane.xlu0 %1135
        %v1137 = vrsqrt.pop %v1122
        %v1138 = vmul.f32 %v1122, %v1137
        %vm1139 = vcmp.eq.f32.partialorder %v1122, inf
        %v1140 = vsel %vm1139, %v1122, %v1138
        %vm1141 = vcmp.eq.f32.partialorder %v1122, 0.0
        %v1142 = vand.u32 %v1122, 2147483648
        %v1143 = vsel %vm1141, %v1142, %v1140
        %v1144 = vrsqrt.pop %v1124
        %v1145 = vmul.f32 %v1124, %v1144
        %vm1146 = vcmp.eq.f32.partialorder %v1124, inf
        %v1147 = vsel %vm1146, %v1124, %v1145
        %vm1148 = vcmp.eq.f32.partialorder %v1124, 0.0
        %v1149 = vand.u32 %v1124, 2147483648
        %v1150 = vsel %vm1148, %v1149, %v1147
        %v1151 = vrsqrt.pop %v1126
        %v1152 = vmul.f32 %v1126, %v1151
        %vm1153 = vcmp.eq.f32.partialorder %v1126, inf
        %v1154 = vsel %vm1153, %v1126, %v1152
        %vm1155 = vcmp.eq.f32.partialorder %v1126, 0.0
        %v1156 = vand.u32 %v1126, 2147483648
        %v1157 = vsel %vm1155, %v1156, %v1154
        %v1158 = vrsqrt.pop %v1128
        %v1159 = vmul.f32 %v1128, %v1158
        %vm1160 = vcmp.eq.f32.partialorder %v1128, inf
        %v1161 = vsel %vm1160, %v1128, %v1159
        %vm1162 = vcmp.eq.f32.partialorder %v1128, 0.0
        %v1163 = vand.u32 %v1128, 2147483648
        %v1164 = vsel %vm1162, %v1163, %v1161
        %v1165 = vrsqrt.pop %v1130
        %v1166 = vmul.f32 %v1130, %v1165
        %vm1167 = vcmp.eq.f32.partialorder %v1130, inf
        %v1168 = vsel %vm1167, %v1130, %v1166
        %vm1169 = vcmp.eq.f32.partialorder %v1130, 0.0
        %v1170 = vand.u32 %v1130, 2147483648
        %v1171 = vsel %vm1169, %v1170, %v1168
        %v1172 = vrsqrt.pop %v1132
        %v1173 = vmul.f32 %v1132, %v1172
        %vm1174 = vcmp.eq.f32.partialorder %v1132, inf
        %v1175 = vsel %vm1174, %v1132, %v1173
        %vm1176 = vcmp.eq.f32.partialorder %v1132, 0.0
        %v1177 = vand.u32 %v1132, 2147483648
        %v1178 = vsel %vm1176, %v1177, %v1175
        %v1179 = vrsqrt.pop %v1134
        %v1180 = vmul.f32 %v1134, %v1179
        %vm1181 = vcmp.eq.f32.partialorder %v1134, inf
        %v1182 = vsel %vm1181, %v1134, %v1180
        %vm1183 = vcmp.eq.f32.partialorder %v1134, 0.0
        %v1184 = vand.u32 %v1134, 2147483648
        %v1185 = vsel %vm1183, %v1184, %v1182
        %v1186 = vrsqrt.pop %v1136
        %v1187 = vmul.f32 %v1136, %v1186
        %vm1188 = vcmp.eq.f32.partialorder %v1136, inf
        %v1189 = vsel %vm1188, %v1136, %v1187
        %vm1190 = vcmp.eq.f32.partialorder %v1136, 0.0
        %v1191 = vand.u32 %v1136, 2147483648
        %v1192 = vsel %vm1190, %v1191, %v1189
        %v1193 = vmax.f32 %v1143, 1e-15
        %v1194 = vmax.f32 %v1150, 1e-15
        %v1195 = vmax.f32 %v1157, 1e-15
        %v1196 = vmax.f32 %v1164, 1e-15
        %v1197 = vmax.f32 %v1171, 1e-15
        %v1198 = vmax.f32 %v1178, 1e-15
        %v1199 = vmax.f32 %v1185, 1e-15
        %v1200 = vmax.f32 %v1192, 1e-15
        %v1201 = vmax.f32 %v1193, -0.9999999
        %v1202 = vmax.f32 %v1194, -0.9999999
        %v1203 = vmax.f32 %v1195, -0.9999999
        %v1204 = vmax.f32 %v1196, -0.9999999
        %v1205 = vmax.f32 %v1197, -0.9999999
        %v1206 = vmax.f32 %v1198, -0.9999999
        %v1207 = vmax.f32 %v1199, -0.9999999
        %v1208 = vmax.f32 %v1200, -0.9999999
        %v1209 = vmin.f32 %v1201, 0.9999999
        %v1210 = vmin.f32 %v1202, 0.9999999
        %v1211 = vmin.f32 %v1203, 0.9999999
        %v1212 = vmin.f32 %v1204, 0.9999999
        %v1213 = vmin.f32 %v1205, 0.9999999
        %v1214 = vmin.f32 %v1206, 0.9999999
        %v1215 = vmin.f32 %v1207, 0.9999999
        %v1216 = vmin.f32 %v1208, 0.9999999
        %v1217 = vadd.f32 %v1209, 1.0
        %v1218 = vadd.f32 %v1210, 1.0
        %v1219 = vadd.f32 %v1211, 1.0
        %v1220 = vadd.f32 %v1212, 1.0
        %v1221 = vadd.f32 %v1213, 1.0
        %v1222 = vadd.f32 %v1214, 1.0
        %v1223 = vadd.f32 %v1215, 1.0
        %v1224 = vadd.f32 %v1216, 1.0
        %v1225 = vsub.f32 1.0, %v1209
        %v1226 = vsub.f32 1.0, %v1210
        %v1227 = vsub.f32 1.0, %v1211
        %v1228 = vsub.f32 1.0, %v1212
        %v1229 = vsub.f32 1.0, %v1213
        %v1230 = vsub.f32 1.0, %v1214
        %v1231 = vsub.f32 1.0, %v1215
        %v1232 = vsub.f32 1.0, %v1216
        %v1233 = vrcp.pop %v1225
        %v1234 = vmul.f32 %v1217, %v1233
        %v1235 = vrcp.pop %v1226
        %v1236 = vmul.f32 %v1218, %v1235
        %v1237 = vrcp.pop %v1227
        %v1238 = vmul.f32 %v1219, %v1237
        %v1239 = vrcp.pop %v1228
        %v1240 = vmul.f32 %v1220, %v1239
        %v1241 = vrcp.pop %v1229
        %v1242 = vmul.f32 %v1221, %v1241
        %v1243 = vrcp.pop %v1230
        %v1244 = vmul.f32 %v1222, %v1243
        %v1245 = vrcp.pop %v1231
        %v1246 = vmul.f32 %v1223, %v1245
        %v1247 = vrcp.pop %v1232
        %v1248 = vmul.f32 %v1224, %v1247
        %v1249 = vlog2.pop %v1234
        %v1250 = vmul.f32 %v1249, 0.6931472
        %v1251 = vlog2.pop %v1236
        %v1252 = vmul.f32 %v1251, 0.6931472
        %v1253 = vlog2.pop %v1238
        %v1254 = vmul.f32 %v1253, 0.6931472
        %v1255 = vlog2.pop %v1240
        %v1256 = vmul.f32 %v1255, 0.6931472
        %v1257 = vlog2.pop %v1242
        %v1258 = vmul.f32 %v1257, 0.6931472
        %v1259 = vlog2.pop %v1244
        %v1260 = vmul.f32 %v1259, 0.6931472
        %v1261 = vlog2.pop %v1246
        %v1262 = vmul.f32 %v1261, 0.6931472
        %v1263 = vlog2.pop %v1248
        %v1264 = vmul.f32 %v1263, 0.6931472
        %v1265 = vmul.f32 %v1250, 0.5
        %v1266 = vmul.f32 %v1252, 0.5
        %v1267 = vmul.f32 %v1254, 0.5
        %v1268 = vmul.f32 %v1256, 0.5
        %v1269 = vmul.f32 %v1258, 0.5
        %v1270 = vmul.f32 %v1260, 0.5
        %v1271 = vmul.f32 %v1262, 0.5
        %v1272 = vmul.f32 %v1264, 0.5
        %v1273 = vrcp.pop %v1193
        %v1274 = vmul.f32 %v1265, %v1273
        %v1275 = vrcp.pop %v1194
        %v1276 = vmul.f32 %v1266, %v1275
        %v1277 = vrcp.pop %v1195
        %v1278 = vmul.f32 %v1267, %v1277
        %v1279 = vrcp.pop %v1196
        %v1280 = vmul.f32 %v1268, %v1279
        %v1281 = vrcp.pop %v1197
        %v1282 = vmul.f32 %v1269, %v1281
        %v1283 = vrcp.pop %v1198
        %v1284 = vmul.f32 %v1270, %v1283
        %v1285 = vrcp.pop %v1199
        %v1286 = vmul.f32 %v1271, %v1285
        %v1287 = vrcp.pop %v1200
        %v1288 = vmul.f32 %v1272, %v1287
        %v1289 = vmul.f32 %v1274, %v1105
        %v1290 = vmul.f32 %v1276, %v1106
        %v1291 = vmul.f32 %v1278, %v1107
        %v1292 = vmul.f32 %v1280, %v1108
        %v1293 = vmul.f32 %v1282, %v1109
        %v1294 = vmul.f32 %v1284, %v1110
        %v1295 = vmul.f32 %v1286, %v1111
        %v1296 = vmul.f32 %v1288, %v1112
        %v1297 = vmax.f32 %v1289, 0.0
        %v1298 = vmax.f32 %v1290, 0.0
        %v1299 = vmax.f32 %v1291, 0.0
        %v1300 = vmax.f32 %v1292, 0.0
        %v1301 = vmax.f32 %v1293, 0.0
        %v1302 = vmax.f32 %v1294, 0.0
        %v1303 = vmax.f32 %v1295, 0.0
        %v1304 = vmax.f32 %v1296, 0.0
        %v1305 = vlaneseq
        %v1306 = vand.u32 %v1305, 127
        %vm1307 = vcmp.lt.s32.totalorder %v1306, 80
        %v1308 = vsel %vm1307, %v1297, 0.0
        %v1309 = vsel %vm1307, %v1298, 0.0
        %v1310 = vsel %vm1307, %v1299, 0.0
        %v1311 = vsel %vm1307, %v1300, 0.0
        %v1312 = vsel %vm1307, %v1301, 0.0
        %v1313 = vsel %vm1307, %v1302, 0.0
        %v1314 = vsel %vm1307, %v1303, 0.0
        %v1315 = vsel %vm1307, %v1304, 0.0
        %v1316 = vmul.f32 %v1308, %v1308
        %v1317 = vmul.f32 %v1309, %v1309
        %v1318 = vmul.f32 %v1310, %v1310
        %v1319 = vmul.f32 %v1311, %v1311
        %v1320 = vmul.f32 %v1312, %v1312
        %v1321 = vmul.f32 %v1313, %v1313
        %v1322 = vmul.f32 %v1314, %v1314
        %v1323 = vmul.f32 %v1315, %v1315
        %1324 = vadd.xlane.f32.xlu0 %v1316
        %v1325 = vpop.xlane.xlu0 %1324
        %1326 = vadd.xlane.f32.xlu0 %v1317
        %v1327 = vpop.xlane.xlu0 %1326
        %1328 = vadd.xlane.f32.xlu0 %v1318
        %v1329 = vpop.xlane.xlu0 %1328
        %1330 = vadd.xlane.f32.xlu0 %v1319
        %v1331 = vpop.xlane.xlu0 %1330
        %1332 = vadd.xlane.f32.xlu0 %v1320
        %v1333 = vpop.xlane.xlu0 %1332
        %1334 = vadd.xlane.f32.xlu0 %v1321
        %v1335 = vpop.xlane.xlu0 %1334
        %1336 = vadd.xlane.f32.xlu0 %v1322
        %v1337 = vpop.xlane.xlu0 %1336
        %1338 = vadd.xlane.f32.xlu0 %v1323
        %v1339 = vpop.xlane.xlu0 %1338
        %v1340 = vrsqrt.pop %v1325
        %v1341 = vmul.f32 %v1325, %v1340
        %vm1342 = vcmp.eq.f32.partialorder %v1325, inf
        %v1343 = vsel %vm1342, %v1325, %v1341
        %vm1344 = vcmp.eq.f32.partialorder %v1325, 0.0
        %v1345 = vand.u32 %v1325, 2147483648
        %v1346 = vsel %vm1344, %v1345, %v1343
        %v1347 = vrsqrt.pop %v1327
        %v1348 = vmul.f32 %v1327, %v1347
        %vm1349 = vcmp.eq.f32.partialorder %v1327, inf
        %v1350 = vsel %vm1349, %v1327, %v1348
        %vm1351 = vcmp.eq.f32.partialorder %v1327, 0.0
        %v1352 = vand.u32 %v1327, 2147483648
        %v1353 = vsel %vm1351, %v1352, %v1350
        %v1354 = vrsqrt.pop %v1329
        %v1355 = vmul.f32 %v1329, %v1354
        %vm1356 = vcmp.eq.f32.partialorder %v1329, inf
        %v1357 = vsel %vm1356, %v1329, %v1355
        %vm1358 = vcmp.eq.f32.partialorder %v1329, 0.0
        %v1359 = vand.u32 %v1329, 2147483648
        %v1360 = vsel %vm1358, %v1359, %v1357
        %v1361 = vrsqrt.pop %v1331
        %v1362 = vmul.f32 %v1331, %v1361
        %vm1363 = vcmp.eq.f32.partialorder %v1331, inf
        %v1364 = vsel %vm1363, %v1331, %v1362
        %vm1365 = vcmp.eq.f32.partialorder %v1331, 0.0
        %v1366 = vand.u32 %v1331, 2147483648
        %v1367 = vsel %vm1365, %v1366, %v1364
        %v1368 = vrsqrt.pop %v1333
        %v1369 = vmul.f32 %v1333, %v1368
        %vm1370 = vcmp.eq.f32.partialorder %v1333, inf
        %v1371 = vsel %vm1370, %v1333, %v1369
        %vm1372 = vcmp.eq.f32.partialorder %v1333, 0.0
        %v1373 = vand.u32 %v1333, 2147483648
        %v1374 = vsel %vm1372, %v1373, %v1371
        %v1375 = vrsqrt.pop %v1335
        %v1376 = vmul.f32 %v1335, %v1375
        %vm1377 = vcmp.eq.f32.partialorder %v1335, inf
        %v1378 = vsel %vm1377, %v1335, %v1376
        %vm1379 = vcmp.eq.f32.partialorder %v1335, 0.0
        %v1380 = vand.u32 %v1335, 2147483648
        %v1381 = vsel %vm1379, %v1380, %v1378
        %v1382 = vrsqrt.pop %v1337
        %v1383 = vmul.f32 %v1337, %v1382
        %vm1384 = vcmp.eq.f32.partialorder %v1337, inf
        %v1385 = vsel %vm1384, %v1337, %v1383
        %vm1386 = vcmp.eq.f32.partialorder %v1337, 0.0
        %v1387 = vand.u32 %v1337, 2147483648
        %v1388 = vsel %vm1386, %v1387, %v1385
        %v1389 = vrsqrt.pop %v1339
        %v1390 = vmul.f32 %v1339, %v1389
        %vm1391 = vcmp.eq.f32.partialorder %v1339, inf
        %v1392 = vsel %vm1391, %v1339, %v1390
        %vm1393 = vcmp.eq.f32.partialorder %v1339, 0.0
        %v1394 = vand.u32 %v1339, 2147483648
        %v1395 = vsel %vm1393, %v1394, %v1392
        %v1396 = vmax.f32 %v1346, 1e-15
        %v1397 = vmax.f32 %v1353, 1e-15
        %v1398 = vmax.f32 %v1360, 1e-15
        %v1399 = vmax.f32 %v1367, 1e-15
        %v1400 = vmax.f32 %v1374, 1e-15
        %v1401 = vmax.f32 %v1381, 1e-15
        %v1402 = vmax.f32 %v1388, 1e-15
        %v1403 = vmax.f32 %v1395, 1e-15
        %v1404 = vtanh.pop %v1396
        %v1405 = vtanh.pop %v1397
        %v1406 = vtanh.pop %v1398
        %v1407 = vtanh.pop %v1399
        %v1408 = vtanh.pop %v1400
        %v1409 = vtanh.pop %v1401
        %v1410 = vtanh.pop %v1402
        %v1411 = vtanh.pop %v1403
        %v1412 = vrcp.pop %v1396
        %v1413 = vmul.f32 %v1404, %v1412
        %v1414 = vrcp.pop %v1397
        %v1415 = vmul.f32 %v1405, %v1414
        %v1416 = vrcp.pop %v1398
        %v1417 = vmul.f32 %v1406, %v1416
        %v1418 = vrcp.pop %v1399
        %v1419 = vmul.f32 %v1407, %v1418
        %v1420 = vrcp.pop %v1400
        %v1421 = vmul.f32 %v1408, %v1420
        %v1422 = vrcp.pop %v1401
        %v1423 = vmul.f32 %v1409, %v1422
        %v1424 = vrcp.pop %v1402
        %v1425 = vmul.f32 %v1410, %v1424
        %v1426 = vrcp.pop %v1403
        %v1427 = vmul.f32 %v1411, %v1426
        %v1428 = vmul.f32 %v1413, %v1308
        %v1429 = vmul.f32 %v1415, %v1309
        %v1430 = vmul.f32 %v1417, %v1310
        %v1431 = vmul.f32 %v1419, %v1311
        %v1432 = vmul.f32 %v1421, %v1312
        %v1433 = vmul.f32 %v1423, %v1313
        %v1434 = vmul.f32 %v1425, %v1314
        %v1435 = vmul.f32 %v1427, %v1315
        %v1436 = vmax.f32 %v1404, 1e-15
        %v1437 = vmax.f32 %v1405, 1e-15
        %v1438 = vmax.f32 %v1406, 1e-15
        %v1439 = vmax.f32 %v1407, 1e-15
        %v1440 = vmax.f32 %v1408, 1e-15
        %v1441 = vmax.f32 %v1409, 1e-15
        %v1442 = vmax.f32 %v1410, 1e-15
        %v1443 = vmax.f32 %v1411, 1e-15
        %vm1444 = vcmp.gt.f32.partialorder %v1436, 0.996
        %vm1445 = vcmp.gt.f32.partialorder %v1437, 0.996
        %vm1446 = vcmp.gt.f32.partialorder %v1438, 0.996
        %vm1447 = vcmp.gt.f32.partialorder %v1439, 0.996
        %vm1448 = vcmp.gt.f32.partialorder %v1440, 0.996
        %vm1449 = vcmp.gt.f32.partialorder %v1441, 0.996
        %vm1450 = vcmp.gt.f32.partialorder %v1442, 0.996
        %vm1451 = vcmp.gt.f32.partialorder %v1443, 0.996
        %v1452 = vrcp.pop %v1436
        %v1453 = vmul.f32 0.996, %v1452
        %v1454 = vrcp.pop %v1437
        %v1455 = vmul.f32 0.996, %v1454
        %v1456 = vrcp.pop %v1438
        %v1457 = vmul.f32 0.996, %v1456
        %v1458 = vrcp.pop %v1439
        %v1459 = vmul.f32 0.996, %v1458
        %v1460 = vrcp.pop %v1440
        %v1461 = vmul.f32 0.996, %v1460
        %v1462 = vrcp.pop %v1441
        %v1463 = vmul.f32 0.996, %v1462
        %v1464 = vrcp.pop %v1442
        %v1465 = vmul.f32 0.996, %v1464
        %v1466 = vrcp.pop %v1443
        %v1467 = vmul.f32 0.996, %v1466
        %v1468 = vsel %vm1444, %v1453, 1.0
        %v1469 = vsel %vm1445, %v1455, 1.0
        %v1470 = vsel %vm1446, %v1457, 1.0
        %v1471 = vsel %vm1447, %v1459, 1.0
        %v1472 = vsel %vm1448, %v1461, 1.0
        %v1473 = vsel %vm1449, %v1463, 1.0
        %v1474 = vsel %vm1450, %v1465, 1.0
        %v1475 = vsel %vm1451, %v1467, 1.0
        %v1476 = vmul.f32 %v1468, %v1428
        %v1477 = vmul.f32 %v1469, %v1429
        %v1478 = vmul.f32 %v1470, %v1430
        %v1479 = vmul.f32 %v1471, %v1431
        %v1480 = vmul.f32 %v1472, %v1432
        %v1481 = vmul.f32 %v1473, %v1433
        %v1482 = vmul.f32 %v1474, %v1434
        %v1483 = vmul.f32 %v1475, %v1435
        %1484 = vst [vmem:[%s204] sm:$0xff] %v1476
        %1485 = vst [vmem:[%s204 + $0x8] sm:$0xff] %v1477
        %1486 = vst [vmem:[%s204 + $0x10] sm:$0xff] %v1478
        %1487 = vst [vmem:[%s204 + $0x18] sm:$0xff] %v1479
        %1488 = vst [vmem:[%s204 + $0x20] sm:$0xff] %v1480
        %1489 = vst [vmem:[%s204 + $0x28] sm:$0xff] %v1481
        %1490 = vst [vmem:[%s204 + $0x30] sm:$0xff] %v1482
        %1491 = vst [vmem:[%s204 + $0x38] sm:$0xff] %v1483
        %s1492 = sand.u32 %s97, 1
        %s1493 = scalar_lea.sflag [#allocation4], %s1492
        %s1494 = sand.u32 %s97, 1
        %s1495 = smul.addr %s1494, 64
        %s1496 = scalar_lea.vmem [#allocation7], %s1495
        // Predicated region
        $region41: #{tpu_custom_call.1} parent=31 // pred_check
          %p1497 = pneg %p107
        $region42: #{tpu_custom_call.1} parent=31 // pred_check_branch
          %1499 = sbr.rel (%p1497) target = $region44
        $region43: #{tpu_custom_call.1} parent=31 // pred_region
          %s1500 = smul.u32 8, %s21
          %s1502 = ssub.s32 1024, 1024
          %1503 = vsyncadd %s1493, %s1502
          %s1504 = smul.addr %s1500, 128
          %s1505 = scalar_lea.hbm %s3, %s1504
          %s1506 = sshll.u32 %s1496, 4
          %s1507 = int_to_ptr.vmem [resolvable:$true] %s1506
          %1512 = dma.vmem_to_hbm [thread:$0]  %s1507, 1024, %s1505, %s1493, 128, 128, 8
        $region44: #{tpu_custom_call.1} parent=31 // pred_fallthru
          _
      $region32: #{tpu_custom_call.1} parent=5 // pred_fallthru
        _
      %p1513 = scmp.le.s32.totalorder 2, %s16
      // Predicated region
      $region45: #{tpu_custom_call.1} parent=5 // pred_check
        %p1514 = pneg %p1513
      $region46: #{tpu_custom_call.1} parent=5 // pred_check_branch
        %1516 = sbr.rel (%p1514) target = $region48
      $region47: #{tpu_custom_call.1} parent=5 // pred_region
        %s1517 = ssub.s32 %s16, 2
        // Predicated region
        $region49: #{tpu_custom_call.1} parent=47 // pred_check
          %p1518 = pneg %p113
        $region50: #{tpu_custom_call.1} parent=47 // pred_check_branch
          %1520 = sbr.rel (%p1518) target = $region52
        $region51: #{tpu_custom_call.1} parent=47 // pred_region
          %s1521 = sand.u32 %s98, 1
          %s1522 = scalar_lea.sflag [#allocation4], %s1521
          %s1523 = sand.u32 %s98, 1
          %s1524 = smul.addr %s1523, 64
          %s1525 = scalar_lea.vmem [#allocation7], %s1524
          %1526 = dma.done %s1522, 1024
        $region52: #{tpu_custom_call.1} parent=47 // pred_fallthru
          _
      $region48: #{tpu_custom_call.1} parent=5 // pred_fallthru
        _
    $region6: #{tpu_custom_call.1} parent=1 // loop_footer
      %s20 = sadd.s32 1, %s16
    $region7: #{tpu_custom_call.1} parent=1 // loop_footer_branch
      %15 = sbr.rel target = $region3
    $region8: #{tpu_custom_call.1} parent=1 // loop_exit
      _
    %1527 = vsyncpa [#allocation3], 1
    %s1528 = scalar_lea.sflag [#allocation3], 1
    %1529 = vsyncpa %s1528, 1
    %1530 = vsyncpa [#allocation6], 1
    %1531 = vsyncpa [#allocation4], 1
    %s1532 = scalar_lea.sflag [#allocation4], 1
    %1533 = vsyncpa %s1532, 1

</llo_original>
